<compile_context>
chip_gen: v6e
topology: v6e:2x2x1
jax: 0.10.0
libtpu: 0.0.40
codegen_flags: <defaults>
</compile_context>

<pallas_src>
import functools

import jax
import jax.numpy as jnp
from jax import lax
from jax.experimental import pallas as pl
from jax.experimental.pallas import tpu as pltpu

# ----- small Mamba2Config-like configuration -----
BATCH = 2
SEQ = 8
HIDDEN = 32
EXPAND = 2
INTER = EXPAND * HIDDEN                  # intermediate_size = 64
NUM_HEADS = 4
HEAD_DIM = INTER // NUM_HEADS            # 16
NGROUPS = 1
STATE = 16                               # ssm_state_size
CONV_K = 4                               # conv_kernel
GTS = NGROUPS * STATE                    # groups_time_state_size = 16
CONV_DIM = INTER + 2 * GTS               # 96
PROJ = INTER + CONV_DIM + NUM_HEADS      # 164  (d_mlp == 0)
EPS = 1e-5                               # layer_norm_epsilon


def _softplus(x):
    # matches torch.nn.functional.softplus (threshold=20)
    return jnp.where(x > 20.0, x, jnp.log1p(jnp.exp(jnp.minimum(x, 20.0))))


def _silu(x):
    return x * jax.nn.sigmoid(x)


# ---------------------------------------------------------------------------
# Fused Mamba2Mixer kernel (one grid step per batch element)
# ---------------------------------------------------------------------------

def _mamba2_fused_kernel(
        a_ref, d_ref, dtb_ref,            # SMEM: (NUM_HEADS,) each -- A, D, dt_bias
        x_ref, mask_ref,                  # VMEM: (1, L, H), (1, L, 1)
        wg_ref, whbc_ref, wdtT_ref,       # VMEM: (H, INTER), (H, CONV_DIM), (NH, H)
        cw_ref, cb_ref,                   # VMEM: (K, CONV_DIM), (1, CONV_DIM)
        nw_ref, wo_ref,                   # VMEM: (1, INTER), (INTER, H)
        o_ref,                            # VMEM: (1, L, H)
        *, num_heads, n_groups, head_dim, intermediate, state, eps):
    L = x_ref.shape[1]
    K = cw_ref.shape[0]
    gts = n_groups * state
    hpg = num_heads // n_groups

    m = mask_ref[0]                                        # (L, 1) padding mask
    x2d = x_ref[0] * m                                     # (L, H)

    # ---- in_proj, emitted as three separately lane-aligned pieces ----------
    gate = jnp.dot(x2d, wg_ref[...], preferred_element_type=jnp.float32)   # (L, INTER)
    hbc = jnp.dot(x2d, whbc_ref[...], preferred_element_type=jnp.float32)  # (L, CONV_DIM)
    dt_t = lax.dot_general(wdtT_ref[...], x2d, (((1,), (1,)), ((), ())),
                           preferred_element_type=jnp.float32)             # (NH, L)

    # time-index iotas shared by the conv shift matrices and the causal mask
    rows = lax.broadcasted_iota(jnp.int32, (L, L), 0)
    cols = lax.broadcasted_iota(jnp.int32, (L, L), 1)
    causal = rows >= cols
    causalf = causal.astype(jnp.float32)

    # ---- causal depthwise conv1d (K taps) + SiLU ----------------------------
    # Shift-by-k along time is a tiny (L,L) selection matmul on the otherwise
    # idle MXU: avoids unaligned sublane slices / relayout copies.
    acc = hbc * cw_ref[K - 1:K, :]                         # tap aligned with t
    for k in range(K - 1):
        shift = K - 1 - k
        sh = (rows - cols == shift).astype(jnp.float32)    # sh[t, t-shift] = 1
        shifted = jnp.dot(sh, hbc, preferred_element_type=jnp.float32)
        acc = acc + shifted * cw_ref[k:k + 1, :]
    acc = acc + cb_ref[...]
    hbc_act = (acc * jax.nn.sigmoid(acc)) * m              # SiLU, re-mask padding

    hs = hbc_act[:, :intermediate]                         # (L, INTER)

    # ---- selective SSM scan, quadratic (SSD) form ---------------------------
    #   S_t = exp(dt_t*A) S_{t-1} + dt_t x_t B_t^T ;  y_t = S_t C_t + D x_t
    y_parts = []
    for g in range(n_groups):
        b_lo = intermediate + g * state
        c_lo = intermediate + gts + g * state
        bg = hbc_act[:, b_lo:b_lo + state]                 # (L, S)
        cg = hbc_act[:, c_lo:c_lo + state]                 # (L, S)
        # Gram matrix G[T, t] = C_T . B_t -- shared by all heads of this group.
        gram = lax.dot_general(cg, bg, (((1,), (1,)), ((), ())),
                               preferred_element_type=jnp.float32)   # (L, L)
        for hh in range(hpg):
            h = g * hpg + hh
            a_h = a_ref[h]                                 # SMEM scalars (A < 0)
            d_h = d_ref[h]
            dtb_h = dtb_ref[h]
            dt_row = _softplus(dt_t[h:h + 1, :] + dtb_h)   # (1, L)
            s_row = dt_row * a_h                           # (1, L)
            # inclusive cumulative sum of s over time, column and row form
            csum_col = lax.dot_general(causalf, s_row, (((1,), (1,)), ((), ())),
                                       preferred_element_type=jnp.float32)  # (L,1)
            csum_row = lax.dot_general(s_row, causalf, (((1,), (1,)), ((), ())),
                                       preferred_element_type=jnp.float32)  # (1,L)
            diff = jnp.minimum(csum_col - csum_row, 0.0)   # sum_{t<i<=T} A*dt_i
            decay = jnp.where(causal, jnp.exp(diff), 0.0)  # (L, L)
            wmat = gram * decay * dt_row                   # (L, L)
            xh = hs[:, h * head_dim:(h + 1) * head_dim]    # (L, HD)
            yh = jnp.dot(wmat, xh, preferred_element_type=jnp.float32) + d_h * xh
            y_parts.append(yh)
    y = jnp.concatenate(y_parts, axis=1)                   # (L, INTER), head-major

    # ---- gated RMSNorm + out_proj (fused epilogue) ---------------------------
    gated = y * (gate * jax.nn.sigmoid(gate))              # y * silu(gate)
    var = jnp.mean(gated * gated, axis=-1, keepdims=True)
    normed = gated * lax.rsqrt(var + eps) * nw_ref[...]
    o_ref[0] = jnp.dot(normed, wo_ref[...], preferred_element_type=jnp.float32)


# ---------------------------------------------------------------------------
# Mamba2Mixer forward wrapper
# ---------------------------------------------------------------------------

def mamba2_mixer_forward(hidden_states, params, attention_mask=None):
    B, L, H = hidden_states.shape
    x = hidden_states.astype(jnp.float32)

    # apply_mask_to_padding_states: applied inside the kernel both before
    # in_proj and after the conv (all-ones when no qualifying mask is given).
    if (attention_mask is not None and attention_mask.shape[1] > 1
            and attention_mask.shape[0] > 1):
        mask = attention_mask.astype(jnp.float32)[:, :, None]
    else:
        mask = jnp.ones((B, L, 1), jnp.float32)

    in_w = params["in_proj_w"]
    w_gate = in_w[:, :INTER]                               # (H, INTER)
    w_hbc = in_w[:, INTER:INTER + CONV_DIM]                # (H, CONV_DIM)
    w_dt_t = in_w[:, INTER + CONV_DIM:].T                  # (NH, H)
    A = -jnp.exp(params["A_log"])                          # (NH,)

    kernel = functools.partial(
        _mamba2_fused_kernel, num_heads=NUM_HEADS, n_groups=NGROUPS,
        head_dim=HEAD_DIM, intermediate=INTER, state=STATE, eps=EPS)

    smem = pl.BlockSpec(memory_space=pltpu.MemorySpace.SMEM)

    def rep(shape):
        return pl.BlockSpec(shape, lambda b: (0, 0))

    return pl.pallas_call(
        kernel,
        out_shape=jax.ShapeDtypeStruct((B, L, HIDDEN), jnp.float32),
        grid=(B,),
        in_specs=[
            smem, smem, smem,                                     # A, D, dt_bias
            pl.BlockSpec((1, L, H), lambda b: (b, 0, 0)),         # hidden states
            pl.BlockSpec((1, L, 1), lambda b: (b, 0, 0)),         # padding mask
            rep((H, INTER)),                                      # in_proj: gate
            rep((H, CONV_DIM)),                                   # in_proj: conv in
            rep((NUM_HEADS, H)),                                  # in_proj: dt (T)
            rep((CONV_K, CONV_DIM)),                              # conv weight
            rep((1, CONV_DIM)),                                   # conv bias
            rep((1, INTER)),                                      # gated-norm weight
            rep((INTER, H)),                                      # out_proj weight
        ],
        out_specs=pl.BlockSpec((1, L, HIDDEN), lambda b: (b, 0, 0)),
        compiler_params=pltpu.CompilerParams(
            dimension_semantics=("parallel",)),
    )(A, params["D"], params["dt_bias"], x, mask,
      w_gate, w_hbc, w_dt_t, params["conv_w"], params["conv_b"],
      params["norm_w"], params["out_proj_w"])


# ---------------------------------------------------------------------------
# Pure-JAX reference (sequential recurrence) for correctness checking
# ---------------------------------------------------------------------------

def reference_forward(x, p):
    B, L, H = x.shape
    prec = jax.lax.Precision.HIGHEST
    proj = jnp.einsum("blh,hp->blp", x, p["in_proj_w"], precision=prec)
    gate = proj[..., :INTER]
    hbc = proj[..., INTER:INTER + CONV_DIM]
    dt = proj[..., INTER + CONV_DIM:]

    xp = jnp.pad(hbc, ((0, 0), (CONV_K - 1, 0), (0, 0)))
    conv = jnp.zeros_like(hbc)
    for k in range(CONV_K):
        conv = conv + xp[:, k:k + L, :] * p["conv_w"][k][None, None, :]
    conv = _silu(conv + p["conv_b"][0][None, None, :])

    hs = conv[..., :INTER]
    Bc = conv[..., INTER:INTER + GTS]
    Cc = conv[..., INTER + GTS:]

    xh = hs.reshape(B, L, NUM_HEADS, HEAD_DIM)
    hpg = NUM_HEADS // NGROUPS
    Bh = jnp.repeat(Bc.reshape(B, L, NGROUPS, STATE), hpg, axis=2)
    Ch = jnp.repeat(Cc.reshape(B, L, NGROUPS, STATE), hpg, axis=2)

    A = -jnp.exp(p["A_log"])
    dt_sp = _softplus(dt + p["dt_bias"][None, None, :])   # (B, L, NH)

    state = jnp.zeros((B, NUM_HEADS, HEAD_DIM, STATE), jnp.float32)
    ys = []
    for t in range(L):
        dA = jnp.exp(dt_sp[:, t] * A[None, :])            # (B, NH)
        upd = (dt_sp[:, t][:, :, None, None]
               * xh[:, t][:, :, :, None] * Bh[:, t][:, :, None, :])
        state = dA[:, :, None, None] * state + upd
        y_t = (jnp.sum(state * Ch[:, t][:, :, None, :], axis=-1)
               + p["D"][None, :, None] * xh[:, t])
        ys.append(y_t)
    y = jnp.stack(ys, axis=1).reshape(B, L, INTER)

    h = y * _silu(gate)
    var = jnp.mean(h * h, axis=-1, keepdims=True)
    h = h * jax.lax.rsqrt(var + EPS) * p["norm_w"][0][None, None, :]
    return jnp.einsum("bli,ih->blh", h, p["out_proj_w"], precision=prec)


if __name__ == "__main__":
    key = jax.random.PRNGKey(0)
    k1, k2, k3, k4, kx = jax.random.split(key, 5)

    params = {
        # torch in_proj.weight is (PROJ, HIDDEN); stored transposed for x @ W
        "in_proj_w": jax.random.normal(k1, (HIDDEN, PROJ), jnp.float32)
                     * (1.0 / jnp.sqrt(HIDDEN)),
        # torch conv1d.weight is (CONV_DIM, 1, K); stored as (K, CONV_DIM)
        "conv_w": jax.random.normal(k2, (CONV_K, CONV_DIM), jnp.float32) * 0.3,
        "conv_b": jax.random.normal(k3, (1, CONV_DIM), jnp.float32) * 0.1,
        "dt_bias": jnp.ones((NUM_HEADS,), jnp.float32),
        "A_log": jnp.log(jnp.arange(1, NUM_HEADS + 1, dtype=jnp.float32)),
        "D": jnp.ones((NUM_HEADS,), jnp.float32),
        "norm_w": jnp.ones((1, INTER), jnp.float32),
        # torch out_proj.weight is (HIDDEN, INTER); stored transposed
        "out_proj_w": jax.random.normal(k4, (INTER, HIDDEN), jnp.float32)
                      * (1.0 / jnp.sqrt(INTER)),
    }

    hidden_states = jax.random.normal(kx, (BATCH, SEQ, HIDDEN), jnp.float32)

    out = mamba2_mixer_forward(hidden_states, params)
    out = jax.block_until_ready(out)

    ref = reference_forward(hidden_states, params)
    assert out.shape == (BATCH, SEQ, HIDDEN)
    max_err = float(jnp.max(jnp.abs(out - ref)))
    assert max_err < 2e-3, f"kernel/reference mismatch: max abs err = {max_err}"

    print("KERNEL_OK")
</pallas_src>

<mosaic_0001>
module attributes {stable_mosaic.version = 11 : i64} {
  func.func @_mamba2_fused_kernel(%arg0: i32, %arg1: memref<4xf32, #tpu.memory_space<smem>>, %arg2: memref<4xf32, #tpu.memory_space<smem>>, %arg3: memref<4xf32, #tpu.memory_space<smem>>, %arg4: memref<1x8x32xf32, #tpu.memory_space<vmem>>, %arg5: memref<1x8x1xf32, #tpu.memory_space<vmem>>, %arg6: memref<32x64xf32, #tpu.memory_space<vmem>>, %arg7: memref<32x96xf32, #tpu.memory_space<vmem>>, %arg8: memref<4x32xf32, #tpu.memory_space<vmem>>, %arg9: memref<4x96xf32, #tpu.memory_space<vmem>>, %arg10: memref<1x96xf32, #tpu.memory_space<vmem>>, %arg11: memref<1x64xf32, #tpu.memory_space<vmem>>, %arg12: memref<64x32xf32, #tpu.memory_space<vmem>>, %arg13: memref<1x8x32xf32, #tpu.memory_space<vmem>>) attributes {dimension_semantics = [#tpu.dimension_semantics<parallel>], iteration_bounds = array<i64: 2>, scalar_prefetch = 0 : i64, scratch_operands = 0 : i64, tpu.core_type = #tpu.core_type<tc>, window_params = [{transform_indices = @transform_0, window_bounds = array<i64: 4>}, {transform_indices = @transform_1, window_bounds = array<i64: 4>}, {transform_indices = @transform_2, window_bounds = array<i64: 4>}, {transform_indices = @transform_3, window_bounds = array<i64: 1, 8, 32>}, {transform_indices = @transform_4, window_bounds = array<i64: 1, 8, 1>}, {pipeline_mode = #tpu.pipeline_mode<synchronous>, transform_indices = @transform_5, window_bounds = array<i64: 32, 64>}, {pipeline_mode = #tpu.pipeline_mode<synchronous>, transform_indices = @transform_6, window_bounds = array<i64: 32, 96>}, {pipeline_mode = #tpu.pipeline_mode<synchronous>, transform_indices = @transform_7, window_bounds = array<i64: 4, 32>}, {pipeline_mode = #tpu.pipeline_mode<synchronous>, transform_indices = @transform_8, window_bounds = array<i64: 4, 96>}, {pipeline_mode = #tpu.pipeline_mode<synchronous>, transform_indices = @transform_9, window_bounds = array<i64: 1, 96>}, {pipeline_mode = #tpu.pipeline_mode<synchronous>, transform_indices = @transform_10, window_bounds = array<i64: 1, 64>}, {pipeline_mode = #tpu.pipeline_mode<synchronous>, transform_indices = @transform_11, window_bounds = array<i64: 64, 32>}, {transform_indices = @transform_12, window_bounds = array<i64: 1, 8, 32>}]} {
    %c0 = arith.constant 0 : index
    %c0_0 = arith.constant 0 : index
    %c0_1 = arith.constant 0 : index
    %0 = vector.load %arg5[%c0, %c0_0, %c0_1] : memref<1x8x1xf32, #tpu.memory_space<vmem>>, vector<1x8x1xf32>
    %1 = vector.shape_cast %0 : vector<1x8x1xf32> to vector<8x1xf32>
    %c0_2 = arith.constant 0 : index
    %c0_3 = arith.constant 0 : index
    %c0_4 = arith.constant 0 : index
    %2 = vector.load %arg4[%c0_2, %c0_3, %c0_4] : memref<1x8x32xf32, #tpu.memory_space<vmem>>, vector<1x8x32xf32>
    %3 = vector.shape_cast %2 : vector<1x8x32xf32> to vector<8x32xf32>
    %4 = vector.broadcast %1 : vector<8x1xf32> to vector<8x32xf32>
    %5 = arith.mulf %3, %4 : vector<8x32xf32>
    %c0_5 = arith.constant 0 : index
    %c0_6 = arith.constant 0 : index
    %6 = vector.load %arg6[%c0_5, %c0_6] : memref<32x64xf32, #tpu.memory_space<vmem>>, vector<32x64xf32>
    %cst = arith.constant dense<0.000000e+00> : vector<8x64xf32>
    %7 = tpu.matmul %5, %6, %cst {dimension_numbers = #tpu.dot_dimension_numbers<[1], [0], [0], [1], [0, 0, 1, 1], [], []>} : vector<8x32xf32>, vector<32x64xf32>, vector<8x64xf32> -> vector<8x64xf32>
    %c0_7 = arith.constant 0 : index
    %c0_8 = arith.constant 0 : index
    %8 = vector.load %arg7[%c0_7, %c0_8] : memref<32x96xf32, #tpu.memory_space<vmem>>, vector<32x96xf32>
    %cst_9 = arith.constant dense<0.000000e+00> : vector<8x96xf32>
    %9 = tpu.matmul %5, %8, %cst_9 {dimension_numbers = #tpu.dot_dimension_numbers<[1], [0], [0], [1], [0, 0, 1, 1], [], []>} : vector<8x32xf32>, vector<32x96xf32>, vector<8x96xf32> -> vector<8x96xf32>
    %c0_10 = arith.constant 0 : index
    %c0_11 = arith.constant 0 : index
    %10 = vector.load %arg8[%c0_10, %c0_11] : memref<4x32xf32, #tpu.memory_space<vmem>>, vector<4x32xf32>
    %cst_12 = arith.constant dense<0.000000e+00> : vector<4x8xf32>
    %11 = tpu.matmul %10, %5, %cst_12 {dimension_numbers = #tpu.dot_dimension_numbers<[1], [1], [0], [0], [0, 0, 1, 0], [], []>} : vector<4x32xf32>, vector<8x32xf32>, vector<4x8xf32> -> vector<4x8xf32>
    %12 = tpu.iota {dimensions = array<i32: 0>} : vector<8x8xi32>
    %13 = tpu.iota {dimensions = array<i32: 1>} : vector<8x8xi32>
    %14 = arith.cmpi sge, %12, %13 : vector<8x8xi32>
    %15 = arith.extui %14 : vector<8x8xi1> to vector<8x8xi32>
    %16 = arith.sitofp %15 : vector<8x8xi32> to vector<8x8xf32>
    %c3 = arith.constant 3 : index
    %c0_13 = arith.constant 0 : index
    %17 = vector.load %arg9[%c3, %c0_13] : memref<4x96xf32, #tpu.memory_space<vmem>>, vector<1x96xf32>
    %18 = vector.broadcast %17 : vector<1x96xf32> to vector<8x96xf32>
    %19 = arith.mulf %9, %18 : vector<8x96xf32>
    %20 = arith.subi %12, %13 : vector<8x8xi32>
    %c3_i32 = arith.constant 3 : i32
    %21 = vector.broadcast %c3_i32 : i32 to vector<8x8xi32>
    %22 = arith.cmpi eq, %20, %21 : vector<8x8xi32>
    %23 = arith.extui %22 : vector<8x8xi1> to vector<8x8xi32>
    %24 = arith.sitofp %23 : vector<8x8xi32> to vector<8x8xf32>
    %cst_14 = arith.constant dense<0.000000e+00> : vector<8x96xf32>
    %25 = tpu.matmul %24, %9, %cst_14 {dimension_numbers = #tpu.dot_dimension_numbers<[1], [0], [0], [1], [0, 0, 1, 1], [], []>} : vector<8x8xf32>, vector<8x96xf32>, vector<8x96xf32> -> vector<8x96xf32>
    %c0_15 = arith.constant 0 : index
    %c0_16 = arith.constant 0 : index
    %26 = vector.load %arg9[%c0_15, %c0_16] : memref<4x96xf32, #tpu.memory_space<vmem>>, vector<1x96xf32>
    %27 = vector.broadcast %26 : vector<1x96xf32> to vector<8x96xf32>
    %28 = arith.mulf %25, %27 : vector<8x96xf32>
    %29 = arith.addf %19, %28 : vector<8x96xf32>
    %30 = arith.subi %12, %13 : vector<8x8xi32>
    %c2_i32 = arith.constant 2 : i32
    %31 = vector.broadcast %c2_i32 : i32 to vector<8x8xi32>
    %32 = arith.cmpi eq, %30, %31 : vector<8x8xi32>
    %33 = arith.extui %32 : vector<8x8xi1> to vector<8x8xi32>
    %34 = arith.sitofp %33 : vector<8x8xi32> to vector<8x8xf32>
    %cst_17 = arith.constant dense<0.000000e+00> : vector<8x96xf32>
    %35 = tpu.matmul %34, %9, %cst_17 {dimension_numbers = #tpu.dot_dimension_numbers<[1], [0], [0], [1], [0, 0, 1, 1], [], []>} : vector<8x8xf32>, vector<8x96xf32>, vector<8x96xf32> -> vector<8x96xf32>
    %c1 = arith.constant 1 : index
    %c0_18 = arith.constant 0 : index
    %36 = vector.load %arg9[%c1, %c0_18] : memref<4x96xf32, #tpu.memory_space<vmem>>, vector<1x96xf32>
    %37 = vector.broadcast %36 : vector<1x96xf32> to vector<8x96xf32>
    %38 = arith.mulf %35, %37 : vector<8x96xf32>
    %39 = arith.addf %29, %38 : vector<8x96xf32>
    %40 = arith.subi %12, %13 : vector<8x8xi32>
    %c1_i32 = arith.constant 1 : i32
    %41 = vector.broadcast %c1_i32 : i32 to vector<8x8xi32>
    %42 = arith.cmpi eq, %40, %41 : vector<8x8xi32>
    %43 = arith.extui %42 : vector<8x8xi1> to vector<8x8xi32>
    %44 = arith.sitofp %43 : vector<8x8xi32> to vector<8x8xf32>
    %cst_19 = arith.constant dense<0.000000e+00> : vector<8x96xf32>
    %45 = tpu.matmul %44, %9, %cst_19 {dimension_numbers = #tpu.dot_dimension_numbers<[1], [0], [0], [1], [0, 0, 1, 1], [], []>} : vector<8x8xf32>, vector<8x96xf32>, vector<8x96xf32> -> vector<8x96xf32>
    %c2 = arith.constant 2 : index
    %c0_20 = arith.constant 0 : index
    %46 = vector.load %arg9[%c2, %c0_20] : memref<4x96xf32, #tpu.memory_space<vmem>>, vector<1x96xf32>
    %47 = vector.broadcast %46 : vector<1x96xf32> to vector<8x96xf32>
    %48 = arith.mulf %45, %47 : vector<8x96xf32>
    %49 = arith.addf %39, %48 : vector<8x96xf32>
    %c0_21 = arith.constant 0 : index
    %c0_22 = arith.constant 0 : index
    %50 = vector.load %arg10[%c0_21, %c0_22] : memref<1x96xf32, #tpu.memory_space<vmem>>, vector<1x96xf32>
    %51 = vector.broadcast %50 : vector<1x96xf32> to vector<8x96xf32>
    %52 = arith.addf %49, %51 : vector<8x96xf32>
    %53 = arith.negf %52 : vector<8x96xf32>
    %54 = math.exp %53 : vector<8x96xf32>
    %cst_23 = arith.constant 1.000000e+00 : f32
    %55 = vector.broadcast %cst_23 : f32 to vector<8x96xf32>
    %56 = arith.addf %55, %54 : vector<8x96xf32>
    %57 = arith.divf %55, %56 : vector<8x96xf32>
    %58 = arith.mulf %52, %57 : vector<8x96xf32>
    %59 = vector.broadcast %1 : vector<8x1xf32> to vector<8x96xf32>
    %60 = arith.mulf %58, %59 : vector<8x96xf32>
    %61 = vector.extract_strided_slice %60 {offsets = [0, 0], sizes = [8, 64], strides = [1, 1]} : vector<8x96xf32> to vector<8x64xf32>
    %62 = vector.extract_strided_slice %60 {offsets = [0, 64], sizes = [8, 16], strides = [1, 1]} : vector<8x96xf32> to vector<8x16xf32>
    %63 = vector.extract_strided_slice %60 {offsets = [0, 80], sizes = [8, 16], strides = [1, 1]} : vector<8x96xf32> to vector<8x16xf32>
    %cst_24 = arith.constant dense<0.000000e+00> : vector<8x8xf32>
    %64 = tpu.matmul %63, %62, %cst_24 {dimension_numbers = #tpu.dot_dimension_numbers<[1], [1], [0], [0], [0, 0, 1, 0], [], []>} : vector<8x16xf32>, vector<8x16xf32>, vector<8x8xf32> -> vector<8x8xf32>
    %c0_25 = arith.constant 0 : index
    %65 = memref.load %arg1[%c0_25] : memref<4xf32, #tpu.memory_space<smem>>
    %c0_26 = arith.constant 0 : index
    %66 = memref.load %arg2[%c0_26] : memref<4xf32, #tpu.memory_space<smem>>
    %c0_27 = arith.constant 0 : index
    %67 = memref.load %arg3[%c0_27] : memref<4xf32, #tpu.memory_space<smem>>
    %68 = vector.extract_strided_slice %11 {offsets = [0, 0], sizes = [1, 8], strides = [1, 1]} : vector<4x8xf32> to vector<1x8xf32>
    %69 = vector.broadcast %67 : f32 to vector<1x8xf32>
    %70 = arith.addf %68, %69 : vector<1x8xf32>
    %cst_28 = arith.constant 2.000000e+01 : f32
    %71 = vector.broadcast %cst_28 : f32 to vector<1x8xf32>
    %72 = arith.cmpf ogt, %70, %71 : vector<1x8xf32>
    %cst_29 = arith.constant 2.000000e+01 : f32
    %73 = vector.broadcast %cst_29 : f32 to vector<1x8xf32>
    %74 = arith.minimumf %70, %73 : vector<1x8xf32>
    %75 = math.exp %74 : vector<1x8xf32>
    %76 = math.log1p %75 : vector<1x8xf32>
    %77 = arith.select %72, %70, %76 : vector<1x8xi1>, vector<1x8xf32>
    %78 = vector.broadcast %65 : f32 to vector<1x8xf32>
    %79 = arith.mulf %77, %78 : vector<1x8xf32>
    %cst_30 = arith.constant dense<0.000000e+00> : vector<8x1xf32>
    %80 = tpu.matmul %16, %79, %cst_30 {dimension_numbers = #tpu.dot_dimension_numbers<[1], [1], [0], [0], [0, 0, 1, 0], [], []>} : vector<8x8xf32>, vector<1x8xf32>, vector<8x1xf32> -> vector<8x1xf32>
    %cst_31 = arith.constant dense<0.000000e+00> : vector<1x8xf32>
    %81 = tpu.matmul %79, %16, %cst_31 {dimension_numbers = #tpu.dot_dimension_numbers<[1], [1], [0], [0], [0, 0, 1, 0], [], []>} : vector<1x8xf32>, vector<8x8xf32>, vector<1x8xf32> -> vector<1x8xf32>
    %82 = vector.broadcast %80 : vector<8x1xf32> to vector<8x8xf32>
    %83 = vector.broadcast %81 : vector<1x8xf32> to vector<8x8xf32>
    %84 = arith.subf %82, %83 : vector<8x8xf32>
    %cst_32 = arith.constant 0.000000e+00 : f32
    %85 = vector.broadcast %cst_32 : f32 to vector<8x8xf32>
    %86 = arith.minimumf %84, %85 : vector<8x8xf32>
    %87 = math.exp %86 : vector<8x8xf32>
    %cst_33 = arith.constant 0.000000e+00 : f32
    %88 = vector.broadcast %cst_33 : f32 to vector<8x8xf32>
    %89 = arith.select %14, %87, %88 : vector<8x8xi1>, vector<8x8xf32>
    %90 = arith.mulf %64, %89 : vector<8x8xf32>
    %91 = vector.broadcast %77 : vector<1x8xf32> to vector<8x8xf32>
    %92 = arith.mulf %90, %91 : vector<8x8xf32>
    %93 = vector.extract_strided_slice %61 {offsets = [0, 0], sizes = [8, 16], strides = [1, 1]} : vector<8x64xf32> to vector<8x16xf32>
    %cst_34 = arith.constant dense<0.000000e+00> : vector<8x16xf32>
    %94 = tpu.matmul %92, %93, %cst_34 {dimension_numbers = #tpu.dot_dimension_numbers<[1], [0], [0], [1], [0, 0, 1, 1], [], []>} : vector<8x8xf32>, vector<8x16xf32>, vector<8x16xf32> -> vector<8x16xf32>
    %95 = vector.broadcast %66 : f32 to vector<8x16xf32>
    %96 = arith.mulf %95, %93 : vector<8x16xf32>
    %97 = arith.addf %94, %96 : vector<8x16xf32>
    %c1_35 = arith.constant 1 : index
    %98 = memref.load %arg1[%c1_35] : memref<4xf32, #tpu.memory_space<smem>>
    %c1_36 = arith.constant 1 : index
    %99 = memref.load %arg2[%c1_36] : memref<4xf32, #tpu.memory_space<smem>>
    %c1_37 = arith.constant 1 : index
    %100 = memref.load %arg3[%c1_37] : memref<4xf32, #tpu.memory_space<smem>>
    %101 = vector.extract_strided_slice %11 {offsets = [1, 0], sizes = [1, 8], strides = [1, 1]} : vector<4x8xf32> to vector<1x8xf32>
    %102 = vector.broadcast %100 : f32 to vector<1x8xf32>
    %103 = arith.addf %101, %102 : vector<1x8xf32>
    %cst_38 = arith.constant 2.000000e+01 : f32
    %104 = vector.broadcast %cst_38 : f32 to vector<1x8xf32>
    %105 = arith.cmpf ogt, %103, %104 : vector<1x8xf32>
    %cst_39 = arith.constant 2.000000e+01 : f32
    %106 = vector.broadcast %cst_39 : f32 to vector<1x8xf32>
    %107 = arith.minimumf %103, %106 : vector<1x8xf32>
    %108 = math.exp %107 : vector<1x8xf32>
    %109 = math.log1p %108 : vector<1x8xf32>
    %110 = arith.select %105, %103, %109 : vector<1x8xi1>, vector<1x8xf32>
    %111 = vector.broadcast %98 : f32 to vector<1x8xf32>
    %112 = arith.mulf %110, %111 : vector<1x8xf32>
    %cst_40 = arith.constant dense<0.000000e+00> : vector<8x1xf32>
    %113 = tpu.matmul %16, %112, %cst_40 {dimension_numbers = #tpu.dot_dimension_numbers<[1], [1], [0], [0], [0, 0, 1, 0], [], []>} : vector<8x8xf32>, vector<1x8xf32>, vector<8x1xf32> -> vector<8x1xf32>
    %cst_41 = arith.constant dense<0.000000e+00> : vector<1x8xf32>
    %114 = tpu.matmul %112, %16, %cst_41 {dimension_numbers = #tpu.dot_dimension_numbers<[1], [1], [0], [0], [0, 0, 1, 0], [], []>} : vector<1x8xf32>, vector<8x8xf32>, vector<1x8xf32> -> vector<1x8xf32>
    %115 = vector.broadcast %113 : vector<8x1xf32> to vector<8x8xf32>
    %116 = vector.broadcast %114 : vector<1x8xf32> to vector<8x8xf32>
    %117 = arith.subf %115, %116 : vector<8x8xf32>
    %cst_42 = arith.constant 0.000000e+00 : f32
    %118 = vector.broadcast %cst_42 : f32 to vector<8x8xf32>
    %119 = arith.minimumf %117, %118 : vector<8x8xf32>
    %120 = math.exp %119 : vector<8x8xf32>
    %cst_43 = arith.constant 0.000000e+00 : f32
    %121 = vector.broadcast %cst_43 : f32 to vector<8x8xf32>
    %122 = arith.select %14, %120, %121 : vector<8x8xi1>, vector<8x8xf32>
    %123 = arith.mulf %64, %122 : vector<8x8xf32>
    %124 = vector.broadcast %110 : vector<1x8xf32> to vector<8x8xf32>
    %125 = arith.mulf %123, %124 : vector<8x8xf32>
    %126 = vector.extract_strided_slice %61 {offsets = [0, 16], sizes = [8, 16], strides = [1, 1]} : vector<8x64xf32> to vector<8x16xf32>
    %cst_44 = arith.constant dense<0.000000e+00> : vector<8x16xf32>
    %127 = tpu.matmul %125, %126, %cst_44 {dimension_numbers = #tpu.dot_dimension_numbers<[1], [0], [0], [1], [0, 0, 1, 1], [], []>} : vector<8x8xf32>, vector<8x16xf32>, vector<8x16xf32> -> vector<8x16xf32>
    %128 = vector.broadcast %99 : f32 to vector<8x16xf32>
    %129 = arith.mulf %128, %126 : vector<8x16xf32>
    %130 = arith.addf %127, %129 : vector<8x16xf32>
    %c2_45 = arith.constant 2 : index
    %131 = memref.load %arg1[%c2_45] : memref<4xf32, #tpu.memory_space<smem>>
    %c2_46 = arith.constant 2 : index
    %132 = memref.load %arg2[%c2_46] : memref<4xf32, #tpu.memory_space<smem>>
    %c2_47 = arith.constant 2 : index
    %133 = memref.load %arg3[%c2_47] : memref<4xf32, #tpu.memory_space<smem>>
    %134 = vector.extract_strided_slice %11 {offsets = [2, 0], sizes = [1, 8], strides = [1, 1]} : vector<4x8xf32> to vector<1x8xf32>
    %135 = vector.broadcast %133 : f32 to vector<1x8xf32>
    %136 = arith.addf %134, %135 : vector<1x8xf32>
    %cst_48 = arith.constant 2.000000e+01 : f32
    %137 = vector.broadcast %cst_48 : f32 to vector<1x8xf32>
    %138 = arith.cmpf ogt, %136, %137 : vector<1x8xf32>
    %cst_49 = arith.constant 2.000000e+01 : f32
    %139 = vector.broadcast %cst_49 : f32 to vector<1x8xf32>
    %140 = arith.minimumf %136, %139 : vector<1x8xf32>
    %141 = math.exp %140 : vector<1x8xf32>
    %142 = math.log1p %141 : vector<1x8xf32>
    %143 = arith.select %138, %136, %142 : vector<1x8xi1>, vector<1x8xf32>
    %144 = vector.broadcast %131 : f32 to vector<1x8xf32>
    %145 = arith.mulf %143, %144 : vector<1x8xf32>
    %cst_50 = arith.constant dense<0.000000e+00> : vector<8x1xf32>
    %146 = tpu.matmul %16, %145, %cst_50 {dimension_numbers = #tpu.dot_dimension_numbers<[1], [1], [0], [0], [0, 0, 1, 0], [], []>} : vector<8x8xf32>, vector<1x8xf32>, vector<8x1xf32> -> vector<8x1xf32>
    %cst_51 = arith.constant dense<0.000000e+00> : vector<1x8xf32>
    %147 = tpu.matmul %145, %16, %cst_51 {dimension_numbers = #tpu.dot_dimension_numbers<[1], [1], [0], [0], [0, 0, 1, 0], [], []>} : vector<1x8xf32>, vector<8x8xf32>, vector<1x8xf32> -> vector<1x8xf32>
    %148 = vector.broadcast %146 : vector<8x1xf32> to vector<8x8xf32>
    %149 = vector.broadcast %147 : vector<1x8xf32> to vector<8x8xf32>
    %150 = arith.subf %148, %149 : vector<8x8xf32>
    %cst_52 = arith.constant 0.000000e+00 : f32
    %151 = vector.broadcast %cst_52 : f32 to vector<8x8xf32>
    %152 = arith.minimumf %150, %151 : vector<8x8xf32>
    %153 = math.exp %152 : vector<8x8xf32>
    %cst_53 = arith.constant 0.000000e+00 : f32
    %154 = vector.broadcast %cst_53 : f32 to vector<8x8xf32>
    %155 = arith.select %14, %153, %154 : vector<8x8xi1>, vector<8x8xf32>
    %156 = arith.mulf %64, %155 : vector<8x8xf32>
    %157 = vector.broadcast %143 : vector<1x8xf32> to vector<8x8xf32>
    %158 = arith.mulf %156, %157 : vector<8x8xf32>
    %159 = vector.extract_strided_slice %61 {offsets = [0, 32], sizes = [8, 16], strides = [1, 1]} : vector<8x64xf32> to vector<8x16xf32>
    %cst_54 = arith.constant dense<0.000000e+00> : vector<8x16xf32>
    %160 = tpu.matmul %158, %159, %cst_54 {dimension_numbers = #tpu.dot_dimension_numbers<[1], [0], [0], [1], [0, 0, 1, 1], [], []>} : vector<8x8xf32>, vector<8x16xf32>, vector<8x16xf32> -> vector<8x16xf32>
    %161 = vector.broadcast %132 : f32 to vector<8x16xf32>
    %162 = arith.mulf %161, %159 : vector<8x16xf32>
    %163 = arith.addf %160, %162 : vector<8x16xf32>
    %c3_55 = arith.constant 3 : index
    %164 = memref.load %arg1[%c3_55] : memref<4xf32, #tpu.memory_space<smem>>
    %c3_56 = arith.constant 3 : index
    %165 = memref.load %arg2[%c3_56] : memref<4xf32, #tpu.memory_space<smem>>
    %c3_57 = arith.constant 3 : index
    %166 = memref.load %arg3[%c3_57] : memref<4xf32, #tpu.memory_space<smem>>
    %167 = vector.extract_strided_slice %11 {offsets = [3, 0], sizes = [1, 8], strides = [1, 1]} : vector<4x8xf32> to vector<1x8xf32>
    %168 = vector.broadcast %166 : f32 to vector<1x8xf32>
    %169 = arith.addf %167, %168 : vector<1x8xf32>
    %cst_58 = arith.constant 2.000000e+01 : f32
    %170 = vector.broadcast %cst_58 : f32 to vector<1x8xf32>
    %171 = arith.cmpf ogt, %169, %170 : vector<1x8xf32>
    %cst_59 = arith.constant 2.000000e+01 : f32
    %172 = vector.broadcast %cst_59 : f32 to vector<1x8xf32>
    %173 = arith.minimumf %169, %172 : vector<1x8xf32>
    %174 = math.exp %173 : vector<1x8xf32>
    %175 = math.log1p %174 : vector<1x8xf32>
    %176 = arith.select %171, %169, %175 : vector<1x8xi1>, vector<1x8xf32>
    %177 = vector.broadcast %164 : f32 to vector<1x8xf32>
    %178 = arith.mulf %176, %177 : vector<1x8xf32>
    %cst_60 = arith.constant dense<0.000000e+00> : vector<8x1xf32>
    %179 = tpu.matmul %16, %178, %cst_60 {dimension_numbers = #tpu.dot_dimension_numbers<[1], [1], [0], [0], [0, 0, 1, 0], [], []>} : vector<8x8xf32>, vector<1x8xf32>, vector<8x1xf32> -> vector<8x1xf32>
    %cst_61 = arith.constant dense<0.000000e+00> : vector<1x8xf32>
    %180 = tpu.matmul %178, %16, %cst_61 {dimension_numbers = #tpu.dot_dimension_numbers<[1], [1], [0], [0], [0, 0, 1, 0], [], []>} : vector<1x8xf32>, vector<8x8xf32>, vector<1x8xf32> -> vector<1x8xf32>
    %181 = vector.broadcast %179 : vector<8x1xf32> to vector<8x8xf32>
    %182 = vector.broadcast %180 : vector<1x8xf32> to vector<8x8xf32>
    %183 = arith.subf %181, %182 : vector<8x8xf32>
    %cst_62 = arith.constant 0.000000e+00 : f32
    %184 = vector.broadcast %cst_62 : f32 to vector<8x8xf32>
    %185 = arith.minimumf %183, %184 : vector<8x8xf32>
    %186 = math.exp %185 : vector<8x8xf32>
    %cst_63 = arith.constant 0.000000e+00 : f32
    %187 = vector.broadcast %cst_63 : f32 to vector<8x8xf32>
    %188 = arith.select %14, %186, %187 : vector<8x8xi1>, vector<8x8xf32>
    %189 = arith.mulf %64, %188 : vector<8x8xf32>
    %190 = vector.broadcast %176 : vector<1x8xf32> to vector<8x8xf32>
    %191 = arith.mulf %189, %190 : vector<8x8xf32>
    %192 = vector.extract_strided_slice %61 {offsets = [0, 48], sizes = [8, 16], strides = [1, 1]} : vector<8x64xf32> to vector<8x16xf32>
    %cst_64 = arith.constant dense<0.000000e+00> : vector<8x16xf32>
    %193 = tpu.matmul %191, %192, %cst_64 {dimension_numbers = #tpu.dot_dimension_numbers<[1], [0], [0], [1], [0, 0, 1, 1], [], []>} : vector<8x8xf32>, vector<8x16xf32>, vector<8x16xf32> -> vector<8x16xf32>
    %194 = vector.broadcast %165 : f32 to vector<8x16xf32>
    %195 = arith.mulf %194, %192 : vector<8x16xf32>
    %196 = arith.addf %193, %195 : vector<8x16xf32>
    %197 = tpu.concatenate %97, %130, %163, %196 in 1 : vector<8x16xf32>, vector<8x16xf32>, vector<8x16xf32>, vector<8x16xf32> -> vector<8x64xf32>
    %198 = arith.negf %7 : vector<8x64xf32>
    %199 = math.exp %198 : vector<8x64xf32>
    %cst_65 = arith.constant 1.000000e+00 : f32
    %200 = vector.broadcast %cst_65 : f32 to vector<8x64xf32>
    %201 = arith.addf %200, %199 : vector<8x64xf32>
    %202 = arith.divf %200, %201 : vector<8x64xf32>
    %203 = arith.mulf %7, %202 : vector<8x64xf32>
    %204 = arith.mulf %197, %203 : vector<8x64xf32>
    %205 = arith.mulf %204, %204 : vector<8x64xf32>
    %cst_66 = arith.constant dense<0.000000e+00> : vector<8xf32>
    %206 = vector.multi_reduction <add>, %205, %cst_66 [1] : vector<8x64xf32> to vector<8xf32>
    %207 = vector.shape_cast %206 : vector<8xf32> to vector<8x1xf32>
    %cst_67 = arith.constant 6.400000e+01 : f32
    %208 = vector.broadcast %cst_67 : f32 to vector<8x1xf32>
    %209 = arith.divf %207, %208 : vector<8x1xf32>
    %cst_68 = arith.constant 9.99999974E-6 : f32
    %210 = vector.broadcast %cst_68 : f32 to vector<8x1xf32>
    %211 = arith.addf %209, %210 : vector<8x1xf32>
    %212 = math.rsqrt %211 : vector<8x1xf32>
    %213 = vector.broadcast %212 : vector<8x1xf32> to vector<8x64xf32>
    %214 = arith.mulf %204, %213 : vector<8x64xf32>
    %c0_69 = arith.constant 0 : index
    %c0_70 = arith.constant 0 : index
    %215 = vector.load %arg11[%c0_69, %c0_70] : memref<1x64xf32, #tpu.memory_space<vmem>>, vector<1x64xf32>
    %216 = vector.broadcast %215 : vector<1x64xf32> to vector<8x64xf32>
    %217 = arith.mulf %214, %216 : vector<8x64xf32>
    %c0_71 = arith.constant 0 : index
    %c0_72 = arith.constant 0 : index
    %218 = vector.load %arg12[%c0_71, %c0_72] : memref<64x32xf32, #tpu.memory_space<vmem>>, vector<64x32xf32>
    %cst_73 = arith.constant dense<0.000000e+00> : vector<8x32xf32>
    %219 = tpu.matmul %217, %218, %cst_73 {dimension_numbers = #tpu.dot_dimension_numbers<[1], [0], [0], [1], [0, 0, 1, 1], [], []>} : vector<8x64xf32>, vector<64x32xf32>, vector<8x32xf32> -> vector<8x32xf32>
    %c0_74 = arith.constant 0 : index
    %c0_75 = arith.constant 0 : index
    %c0_76 = arith.constant 0 : index
    %220 = vector.load %arg13[%c0_74, %c0_75, %c0_76] : memref<1x8x32xf32, #tpu.memory_space<vmem>>, vector<1x8x32xf32>
    %221 = vector.shape_cast %220 : vector<1x8x32xf32> to vector<8x32xf32>
    %222 = vector.shape_cast %219 : vector<8x32xf32> to vector<1x8x32xf32>
    tpu.vector_store %arg13[%c0_74, %c0_75, %c0_76], %222 {strides = array<i32>} : memref<1x8x32xf32, #tpu.memory_space<vmem>>, vector<1x8x32xf32>,
    return
  }
  func.func @transform_0(%arg0: i32) -> i32 {
    %c0_i32 = arith.constant 0 : i32
    %c0_i32_0 = arith.constant 0 : i32
    return %c0_i32 : i32
  }
  func.func @transform_1(%arg0: i32) -> i32 {
    %c0_i32 = arith.constant 0 : i32
    %c0_i32_0 = arith.constant 0 : i32
    return %c0_i32 : i32
  }
  func.func @transform_2(%arg0: i32) -> i32 {
    %c0_i32 = arith.constant 0 : i32
    %c0_i32_0 = arith.constant 0 : i32
    return %c0_i32 : i32
  }
  func.func @transform_3(%arg0: i32) -> (i32, i32, i32) {
    %c0_i32 = arith.constant 0 : i32
    %c0_i32_0 = arith.constant 0 : i32
    %c0_i32_1 = arith.constant 0 : i32
    return %arg0, %c0_i32, %c0_i32_0 : i32, i32, i32
  }
  func.func @transform_4(%arg0: i32) -> (i32, i32, i32) {
    %c0_i32 = arith.constant 0 : i32
    %c0_i32_0 = arith.constant 0 : i32
    %c0_i32_1 = arith.constant 0 : i32
    return %arg0, %c0_i32, %c0_i32_0 : i32, i32, i32
  }
  func.func @transform_5(%arg0: i32) -> (i32, i32) {
    %c0_i32 = arith.constant 0 : i32
    %c0_i32_0 = arith.constant 0 : i32
    %c0_i32_1 = arith.constant 0 : i32
    return %c0_i32, %c0_i32_0 : i32, i32
  }
  func.func @transform_6(%arg0: i32) -> (i32, i32) {
    %c0_i32 = arith.constant 0 : i32
    %c0_i32_0 = arith.constant 0 : i32
    %c0_i32_1 = arith.constant 0 : i32
    return %c0_i32, %c0_i32_0 : i32, i32
  }
  func.func @transform_7(%arg0: i32) -> (i32, i32) {
    %c0_i32 = arith.constant 0 : i32
    %c0_i32_0 = arith.constant 0 : i32
    %c0_i32_1 = arith.constant 0 : i32
    return %c0_i32, %c0_i32_0 : i32, i32
  }
  func.func @transform_8(%arg0: i32) -> (i32, i32) {
    %c0_i32 = arith.constant 0 : i32
    %c0_i32_0 = arith.constant 0 : i32
    %c0_i32_1 = arith.constant 0 : i32
    return %c0_i32, %c0_i32_0 : i32, i32
  }
  func.func @transform_9(%arg0: i32) -> (i32, i32) {
    %c0_i32 = arith.constant 0 : i32
    %c0_i32_0 = arith.constant 0 : i32
    %c0_i32_1 = arith.constant 0 : i32
    return %c0_i32, %c0_i32_0 : i32, i32
  }
  func.func @transform_10(%arg0: i32) -> (i32, i32) {
    %c0_i32 = arith.constant 0 : i32
    %c0_i32_0 = arith.constant 0 : i32
    %c0_i32_1 = arith.constant 0 : i32
    return %c0_i32, %c0_i32_0 : i32, i32
  }
  func.func @transform_11(%arg0: i32) -> (i32, i32) {
    %c0_i32 = arith.constant 0 : i32
    %c0_i32_0 = arith.constant 0 : i32
    %c0_i32_1 = arith.constant 0 : i32
    return %c0_i32, %c0_i32_0 : i32, i32
  }
  func.func @transform_12(%arg0: i32) -> (i32, i32, i32) {
    %c0_i32 = arith.constant 0 : i32
    %c0_i32_0 = arith.constant 0 : i32
    %c0_i32_1 = arith.constant 0 : i32
    return %arg0, %c0_i32, %c0_i32_0 : i32, i32, i32
  }
}

</mosaic_0001>

<llo_original>
// kernel: tpu_custom_call.1
$region0: #{tpu_custom_call.1}
  #allocation0 [shape = 'u32[]', space=smem, size = 0x4, offset = 0x4, fixed_abs, tag = 'smem constant byte address 0x4 - core index']
  #allocation1 [shape = 'u32[144,128]{1,0:T(1,128)}', space=vmem, size = 0x12000, scoped, tag = 'internal scratch']
  %s0 = inlined_call_operand.vmem [shape: f32[4], index: 0, kind: input, shape index: {}]
  %s1 = inlined_call_operand.vmem [shape: f32[4], index: 1, kind: input, shape index: {}]
  %s2 = inlined_call_operand.vmem [shape: f32[4], index: 2, kind: input, shape index: {}]
  %s3 = inlined_call_operand.vmem [shape: f32[2,8,32], index: 3, kind: input, shape index: {}]
  %s4 = inlined_call_operand.vmem [shape: f32[2,8,1], index: 4, kind: input, shape index: {}]
  %s5 = inlined_call_operand.vmem [shape: f32[32,64], index: 5, kind: input, shape index: {}]
  %s6 = inlined_call_operand.vmem [shape: f32[32,96], index: 6, kind: input, shape index: {}]
  %s7 = inlined_call_operand.vmem [shape: f32[4,32], index: 7, kind: input, shape index: {}]
  %s8 = inlined_call_operand.vmem [shape: f32[4,96], index: 8, kind: input, shape index: {}]
  %s9 = inlined_call_operand.vmem [shape: f32[1,96], index: 9, kind: input, shape index: {}]
  %s10 = inlined_call_operand.vmem [shape: f32[1,64], index: 10, kind: input, shape index: {}]
  %s11 = inlined_call_operand.vmem [shape: f32[64,32], index: 11, kind: input, shape index: {}]
  %s12 = inlined_call_operand.hbm [shape: f32[2,8,32], index: 12, kind: output, shape index: {}]
  %s13 = sld [smem:[#allocation0]]
  $region93: #{tpu_custom_call.1} parent=0
    _
  %s15 = ssub.s32 1, %s13
  %s16 = scalar_select 0, %s15, %s13
  $region1: #{tpu_custom_call.1} parent=0
    #allocation2 [shape = 'u8[512]{0}', space=smem, size = 0x200, scoped, tag = 'input window, operand 0, single buffered']
    #allocation3 [shape = 's32[2]{0}', space=sflag, size = 0x8, scoped, tag = 'scoped memory for tpu_custom_call.1']
    #allocation4 [shape = 's32[2]{0}', space=sflag, size = 0x8, scoped, tag = 'scoped memory for tpu_custom_call.1']
    #allocation5 [shape = 'u8[512]{0}', space=smem, size = 0x200, scoped, tag = 'input window, operand 1, single buffered']
    #allocation6 [shape = 's32[1]{0}', space=sflag, size = 0x4, scoped, tag = 'scoped memory for tpu_custom_call.1']
    #allocation7 [shape = 'u8[512]{0}', space=smem, size = 0x200, scoped, tag = 'input window, operand 2, single buffered']
    #allocation8 [shape = 'u8[8192]{0}', space=vmem, size = 0x2000, scoped, tag = 'output window, operand 0']
    %17 = vsyncpa [#allocation4], 0
    %18 = vsyncpa [#allocation6], 0
    %19 = vsyncpa [#allocation3], 0
    %s20 = scalar_lea.sflag [#allocation3], 1
    %21 = vsyncpa %s20, 0
    loop: start=0, step=1, limit=4
    $region2: #{tpu_custom_call.1} parent=1 // loop_pre_header
      _
    $region3: #{tpu_custom_call.1} parent=1 // loop_header
      %s23 = sphi 0, %s27
      %p24 = scmp.ge.s32.totalorder %s23, 4
      %s31 = sphi 0, %s31
      %s33 = sphi 0, %s31
      %s34 = sphi 0, %s33
      %s48 = sphi 0, %s34
      %s52 = sphi 0, %s52
      %s54 = sphi 0, %s52
      %s55 = sphi 0, %s54
      %s69 = sphi 0, %s55
      %s73 = sphi 0, %s73
      %s75 = sphi 0, %s73
      %s76 = sphi 0, %s75
      %s90 = sphi 0, %s76
      %s96 = sphi 0, %s98
      %s99 = sphi 0, %s96
      %s100 = sphi 0, %s99
      %s116 = sphi 0, %s100
      %s122 = sphi 0, %s124
      %s125 = sphi 0, %s122
      %s126 = sphi 0, %s125
      %s142 = sphi 0, %s126
      %s146 = sphi 0, %s146
      %s148 = sphi 0, %s146
      %s149 = sphi 0, %s148
      %s163 = sphi 0, %s149
      %s167 = sphi 0, %s167
      %s169 = sphi 0, %s167
      %s170 = sphi 0, %s169
      %s184 = sphi 0, %s170
      %s188 = sphi 0, %s188
      %s190 = sphi 0, %s188
      %s191 = sphi 0, %s190
      %s205 = sphi 0, %s191
      %s209 = sphi 0, %s209
      %s211 = sphi 0, %s209
      %s212 = sphi 0, %s211
      %s226 = sphi 0, %s212
      %s230 = sphi 0, %s230
      %s232 = sphi 0, %s230
      %s233 = sphi 0, %s232
      %s247 = sphi 0, %s233
      %s251 = sphi 0, %s251
      %s253 = sphi 0, %s251
      %s254 = sphi 0, %s253
      %s268 = sphi 0, %s254
      %s272 = sphi 0, %s272
      %s274 = sphi 0, %s272
      %s275 = sphi 0, %s274
      %s289 = sphi 0, %s275
      %s295 = sphi 0, %s297
      %s298 = sphi 0, %s295
      %s299 = sphi 0, %s298
      %s315 = sphi 0, %s299
    $region4: #{tpu_custom_call.1} parent=1 // loop_header_branch
      %26 = sbr.rel (%p24) target = $region8
    $region5: #{tpu_custom_call.1} parent=1 // loop_body
      %s28 = ssub.s32 %s23, 1
      %s29 = ssub.s32 %s23, 2
      %s30 = sadd.s32 %s23, 1
      %s32 = sadd.s32 %s31, 1
      %p35 = scmp.eq.s32.totalorder %s23, 1
      %p36 = scmp.ne.s32.totalorder %s31, %s33
      %p37 = scmp.eq.s32.totalorder %s23, 0
      %p38 = por %p36, %p37
      %p39 = scmp.ne.s32.totalorder %s31, %s33
      %p40 = scmp.eq.s32.totalorder %s28, 1
      %p41 = por %p39, %p40
      %p42 = scmp.ne.s32.totalorder %s33, %s34
      %p43 = scmp.eq.s32.totalorder %s28, 0
      %p44 = por %p42, %p43
      %p45 = scmp.ne.s32.totalorder %s33, %s34
      %p46 = scmp.eq.s32.totalorder %s29, 1
      %p47 = por %p45, %p46
      %p49 = scmp.ne.s32.totalorder %s34, %s48
      %p50 = scmp.eq.s32.totalorder %s29, 0
      %p51 = por %p49, %p50
      %s53 = sadd.s32 %s52, 1
      %p56 = scmp.eq.s32.totalorder %s23, 1
      %p57 = scmp.ne.s32.totalorder %s52, %s54
      %p58 = scmp.eq.s32.totalorder %s23, 0
      %p59 = por %p57, %p58
      %p60 = scmp.ne.s32.totalorder %s52, %s54
      %p61 = scmp.eq.s32.totalorder %s28, 1
      %p62 = por %p60, %p61
      %p63 = scmp.ne.s32.totalorder %s54, %s55
      %p64 = scmp.eq.s32.totalorder %s28, 0
      %p65 = por %p63, %p64
      %p66 = scmp.ne.s32.totalorder %s54, %s55
      %p67 = scmp.eq.s32.totalorder %s29, 1
      %p68 = por %p66, %p67
      %p70 = scmp.ne.s32.totalorder %s55, %s69
      %p71 = scmp.eq.s32.totalorder %s29, 0
      %p72 = por %p70, %p71
      %s74 = sadd.s32 %s73, 1
      %p77 = scmp.eq.s32.totalorder %s23, 1
      %p78 = scmp.ne.s32.totalorder %s73, %s75
      %p79 = scmp.eq.s32.totalorder %s23, 0
      %p80 = por %p78, %p79
      %p81 = scmp.ne.s32.totalorder %s73, %s75
      %p82 = scmp.eq.s32.totalorder %s28, 1
      %p83 = por %p81, %p82
      %p84 = scmp.ne.s32.totalorder %s75, %s76
      %p85 = scmp.eq.s32.totalorder %s28, 0
      %p86 = por %p84, %p85
      %p87 = scmp.ne.s32.totalorder %s75, %s76
      %p88 = scmp.eq.s32.totalorder %s29, 1
      %p89 = por %p87, %p88
      %p91 = scmp.ne.s32.totalorder %s76, %s90
      %p92 = scmp.eq.s32.totalorder %s29, 0
      %p93 = por %p91, %p92
      %s94 = ssub.s32 %s23, %s30
      %p95 = scmp.eq.s32.totalorder %s94, 0
      %s97 = sadd.s32 %s96, 1
      %s98 = scalar_select %p95, %s96, %s97
      %p101 = pneg %p95
      %p102 = scmp.eq.s32.totalorder %s23, 1
      %p103 = por %p101, %p102
      %p104 = scmp.ne.s32.totalorder %s96, %s99
      %p105 = scmp.eq.s32.totalorder %s23, 0
      %p106 = por %p104, %p105
      %p107 = scmp.ne.s32.totalorder %s96, %s99
      %p108 = scmp.eq.s32.totalorder %s28, 1
      %p109 = por %p107, %p108
      %p110 = scmp.ne.s32.totalorder %s99, %s100
      %p111 = scmp.eq.s32.totalorder %s28, 0
      %p112 = por %p110, %p111
      %p113 = scmp.ne.s32.totalorder %s99, %s100
      %p114 = scmp.eq.s32.totalorder %s29, 1
      %p115 = por %p113, %p114
      %p117 = scmp.ne.s32.totalorder %s100, %s116
      %p118 = scmp.eq.s32.totalorder %s29, 0
      %p119 = por %p117, %p118
      %s120 = ssub.s32 %s23, %s30
      %p121 = scmp.eq.s32.totalorder %s120, 0
      %s123 = sadd.s32 %s122, 1
      %s124 = scalar_select %p121, %s122, %s123
      %p127 = pneg %p121
      %p128 = scmp.eq.s32.totalorder %s23, 1
      %p129 = por %p127, %p128
      %p130 = scmp.ne.s32.totalorder %s122, %s125
      %p131 = scmp.eq.s32.totalorder %s23, 0
      %p132 = por %p130, %p131
      %p133 = scmp.ne.s32.totalorder %s122, %s125
      %p134 = scmp.eq.s32.totalorder %s28, 1
      %p135 = por %p133, %p134
      %p136 = scmp.ne.s32.totalorder %s125, %s126
      %p137 = scmp.eq.s32.totalorder %s28, 0
      %p138 = por %p136, %p137
      %p139 = scmp.ne.s32.totalorder %s125, %s126
      %p140 = scmp.eq.s32.totalorder %s29, 1
      %p141 = por %p139, %p140
      %p143 = scmp.ne.s32.totalorder %s126, %s142
      %p144 = scmp.eq.s32.totalorder %s29, 0
      %p145 = por %p143, %p144
      %s147 = sadd.s32 %s146, 1
      %p150 = scmp.eq.s32.totalorder %s23, 1
      %p151 = scmp.ne.s32.totalorder %s146, %s148
      %p152 = scmp.eq.s32.totalorder %s23, 0
      %p153 = por %p151, %p152
      %p154 = scmp.ne.s32.totalorder %s146, %s148
      %p155 = scmp.eq.s32.totalorder %s28, 1
      %p156 = por %p154, %p155
      %p157 = scmp.ne.s32.totalorder %s148, %s149
      %p158 = scmp.eq.s32.totalorder %s28, 0
      %p159 = por %p157, %p158
      %p160 = scmp.ne.s32.totalorder %s148, %s149
      %p161 = scmp.eq.s32.totalorder %s29, 1
      %p162 = por %p160, %p161
      %p164 = scmp.ne.s32.totalorder %s149, %s163
      %p165 = scmp.eq.s32.totalorder %s29, 0
      %p166 = por %p164, %p165
      %s168 = sadd.s32 %s167, 1
      %p171 = scmp.eq.s32.totalorder %s23, 1
      %p172 = scmp.ne.s32.totalorder %s167, %s169
      %p173 = scmp.eq.s32.totalorder %s23, 0
      %p174 = por %p172, %p173
      %p175 = scmp.ne.s32.totalorder %s167, %s169
      %p176 = scmp.eq.s32.totalorder %s28, 1
      %p177 = por %p175, %p176
      %p178 = scmp.ne.s32.totalorder %s169, %s170
      %p179 = scmp.eq.s32.totalorder %s28, 0
      %p180 = por %p178, %p179
      %p181 = scmp.ne.s32.totalorder %s169, %s170
      %p182 = scmp.eq.s32.totalorder %s29, 1
      %p183 = por %p181, %p182
      %p185 = scmp.ne.s32.totalorder %s170, %s184
      %p186 = scmp.eq.s32.totalorder %s29, 0
      %p187 = por %p185, %p186
      %s189 = sadd.s32 %s188, 1
      %p192 = scmp.eq.s32.totalorder %s23, 1
      %p193 = scmp.ne.s32.totalorder %s188, %s190
      %p194 = scmp.eq.s32.totalorder %s23, 0
      %p195 = por %p193, %p194
      %p196 = scmp.ne.s32.totalorder %s188, %s190
      %p197 = scmp.eq.s32.totalorder %s28, 1
      %p198 = por %p196, %p197
      %p199 = scmp.ne.s32.totalorder %s190, %s191
      %p200 = scmp.eq.s32.totalorder %s28, 0
      %p201 = por %p199, %p200
      %p202 = scmp.ne.s32.totalorder %s190, %s191
      %p203 = scmp.eq.s32.totalorder %s29, 1
      %p204 = por %p202, %p203
      %p206 = scmp.ne.s32.totalorder %s191, %s205
      %p207 = scmp.eq.s32.totalorder %s29, 0
      %p208 = por %p206, %p207
      %s210 = sadd.s32 %s209, 1
      %p213 = scmp.eq.s32.totalorder %s23, 1
      %p214 = scmp.ne.s32.totalorder %s209, %s211
      %p215 = scmp.eq.s32.totalorder %s23, 0
      %p216 = por %p214, %p215
      %p217 = scmp.ne.s32.totalorder %s209, %s211
      %p218 = scmp.eq.s32.totalorder %s28, 1
      %p219 = por %p217, %p218
      %p220 = scmp.ne.s32.totalorder %s211, %s212
      %p221 = scmp.eq.s32.totalorder %s28, 0
      %p222 = por %p220, %p221
      %p223 = scmp.ne.s32.totalorder %s211, %s212
      %p224 = scmp.eq.s32.totalorder %s29, 1
      %p225 = por %p223, %p224
      %p227 = scmp.ne.s32.totalorder %s212, %s226
      %p228 = scmp.eq.s32.totalorder %s29, 0
      %p229 = por %p227, %p228
      %s231 = sadd.s32 %s230, 1
      %p234 = scmp.eq.s32.totalorder %s23, 1
      %p235 = scmp.ne.s32.totalorder %s230, %s232
      %p236 = scmp.eq.s32.totalorder %s23, 0
      %p237 = por %p235, %p236
      %p238 = scmp.ne.s32.totalorder %s230, %s232
      %p239 = scmp.eq.s32.totalorder %s28, 1
      %p240 = por %p238, %p239
      %p241 = scmp.ne.s32.totalorder %s232, %s233
      %p242 = scmp.eq.s32.totalorder %s28, 0
      %p243 = por %p241, %p242
      %p244 = scmp.ne.s32.totalorder %s232, %s233
      %p245 = scmp.eq.s32.totalorder %s29, 1
      %p246 = por %p244, %p245
      %p248 = scmp.ne.s32.totalorder %s233, %s247
      %p249 = scmp.eq.s32.totalorder %s29, 0
      %p250 = por %p248, %p249
      %s252 = sadd.s32 %s251, 1
      %p255 = scmp.eq.s32.totalorder %s23, 1
      %p256 = scmp.ne.s32.totalorder %s251, %s253
      %p257 = scmp.eq.s32.totalorder %s23, 0
      %p258 = por %p256, %p257
      %p259 = scmp.ne.s32.totalorder %s251, %s253
      %p260 = scmp.eq.s32.totalorder %s28, 1
      %p261 = por %p259, %p260
      %p262 = scmp.ne.s32.totalorder %s253, %s254
      %p263 = scmp.eq.s32.totalorder %s28, 0
      %p264 = por %p262, %p263
      %p265 = scmp.ne.s32.totalorder %s253, %s254
      %p266 = scmp.eq.s32.totalorder %s29, 1
      %p267 = por %p265, %p266
      %p269 = scmp.ne.s32.totalorder %s254, %s268
      %p270 = scmp.eq.s32.totalorder %s29, 0
      %p271 = por %p269, %p270
      %s273 = sadd.s32 %s272, 1
      %p276 = scmp.eq.s32.totalorder %s23, 1
      %p277 = scmp.ne.s32.totalorder %s272, %s274
      %p278 = scmp.eq.s32.totalorder %s23, 0
      %p279 = por %p277, %p278
      %p280 = scmp.ne.s32.totalorder %s272, %s274
      %p281 = scmp.eq.s32.totalorder %s28, 1
      %p282 = por %p280, %p281
      %p283 = scmp.ne.s32.totalorder %s274, %s275
      %p284 = scmp.eq.s32.totalorder %s28, 0
      %p285 = por %p283, %p284
      %p286 = scmp.ne.s32.totalorder %s274, %s275
      %p287 = scmp.eq.s32.totalorder %s29, 1
      %p288 = por %p286, %p287
      %p290 = scmp.ne.s32.totalorder %s275, %s289
      %p291 = scmp.eq.s32.totalorder %s29, 0
      %p292 = por %p290, %p291
      %s293 = ssub.s32 %s23, %s30
      %p294 = scmp.eq.s32.totalorder %s293, 0
      %s296 = sadd.s32 %s295, 1
      %s297 = scalar_select %p294, %s295, %s296
      %p300 = pneg %p294
      %p301 = scmp.eq.s32.totalorder %s23, 1
      %p302 = por %p300, %p301
      %p303 = scmp.ne.s32.totalorder %s295, %s298
      %p304 = scmp.eq.s32.totalorder %s23, 0
      %p305 = por %p303, %p304
      %p306 = scmp.ne.s32.totalorder %s295, %s298
      %p307 = scmp.eq.s32.totalorder %s28, 1
      %p308 = por %p306, %p307
      %p309 = scmp.ne.s32.totalorder %s298, %s299
      %p310 = scmp.eq.s32.totalorder %s28, 0
      %p311 = por %p309, %p310
      %p312 = scmp.ne.s32.totalorder %s298, %s299
      %p313 = scmp.eq.s32.totalorder %s29, 1
      %p314 = por %p312, %p313
      %p316 = scmp.ne.s32.totalorder %s299, %s315
      %p317 = scmp.eq.s32.totalorder %s29, 0
      %p318 = por %p316, %p317
      %p319 = scmp.le.s32.totalorder 1, %s23
      %p320 = scmp.lt.s32.totalorder %s23, 3
      %p321 = pnand %p319, %p320
      %p322 = pneg %p321
      // Predicated region
      $region9: #{tpu_custom_call.1} parent=5 // pred_check
        _
      $region10: #{tpu_custom_call.1} parent=5 // pred_check_branch
        %324 = sbr.rel (%p321) target = $region12
      $region11: #{tpu_custom_call.1} parent=5 // pred_region
        %s325 = ssub.s32 %s23, 1
        // Predicated region
        $region13: #{tpu_custom_call.1} parent=11 // pred_check
          %p326 = pneg %p44
        $region14: #{tpu_custom_call.1} parent=11 // pred_check_branch
          %328 = sbr.rel (%p326) target = $region16
        $region15: #{tpu_custom_call.1} parent=11 // pred_region
          %s330 = ssub.s32 16, 16
          %331 = vsyncadd [#allocation4], %s330
          %s333 = sshll.u32 %s0, 4
          %s334 = int_to_ptr.vmem [resolvable:$true] %s333
          %336 = dma.vmem_to_smem %s334, 16, [#allocation2], [#allocation4]
        $region16: #{tpu_custom_call.1} parent=11 // pred_fallthru
          _
        // Predicated region
        $region17: #{tpu_custom_call.1} parent=11 // pred_check
          %p337 = pneg %p65
        $region18: #{tpu_custom_call.1} parent=11 // pred_check_branch
          %339 = sbr.rel (%p337) target = $region20
        $region19: #{tpu_custom_call.1} parent=11 // pred_region
          %s341 = ssub.s32 16, 16
          %342 = vsyncadd [#allocation6], %s341
          %s344 = sshll.u32 %s1, 4
          %s345 = int_to_ptr.vmem [resolvable:$true] %s344
          %347 = dma.vmem_to_smem %s345, 16, [#allocation5], [#allocation6]
        $region20: #{tpu_custom_call.1} parent=11 // pred_fallthru
          _
        // Predicated region
        $region21: #{tpu_custom_call.1} parent=11 // pred_check
          %p348 = pneg %p86
        $region22: #{tpu_custom_call.1} parent=11 // pred_check_branch
          %350 = sbr.rel (%p348) target = $region24
        $region23: #{tpu_custom_call.1} parent=11 // pred_region
          %s352 = ssub.s32 16, 16
          %353 = vsyncadd [#allocation6], %s352
          %s355 = sshll.u32 %s2, 4
          %s356 = int_to_ptr.vmem [resolvable:$true] %s355
          %358 = dma.vmem_to_smem %s356, 16, [#allocation7], [#allocation6]
        $region24: #{tpu_custom_call.1} parent=11 // pred_fallthru
          _
        // Predicated region
        $region25: #{tpu_custom_call.1} parent=11 // pred_check
          %p359 = pneg %p159
        $region26: #{tpu_custom_call.1} parent=11 // pred_check_branch
          %361 = sbr.rel (%p359) target = $region28
        $region27: #{tpu_custom_call.1} parent=11 // pred_region
          _
        $region28: #{tpu_custom_call.1} parent=11 // pred_fallthru
          _
        // Predicated region
        $region29: #{tpu_custom_call.1} parent=11 // pred_check
          %p362 = pneg %p180
        $region30: #{tpu_custom_call.1} parent=11 // pred_check_branch
          %364 = sbr.rel (%p362) target = $region32
        $region31: #{tpu_custom_call.1} parent=11 // pred_region
          _
        $region32: #{tpu_custom_call.1} parent=11 // pred_fallthru
          _
        // Predicated region
        $region33: #{tpu_custom_call.1} parent=11 // pred_check
          %p365 = pneg %p201
        $region34: #{tpu_custom_call.1} parent=11 // pred_check_branch
          %367 = sbr.rel (%p365) target = $region36
        $region35: #{tpu_custom_call.1} parent=11 // pred_region
          _
        $region36: #{tpu_custom_call.1} parent=11 // pred_fallthru
          _
        // Predicated region
        $region37: #{tpu_custom_call.1} parent=11 // pred_check
          %p368 = pneg %p222
        $region38: #{tpu_custom_call.1} parent=11 // pred_check_branch
          %370 = sbr.rel (%p368) target = $region40
        $region39: #{tpu_custom_call.1} parent=11 // pred_region
          _
        $region40: #{tpu_custom_call.1} parent=11 // pred_fallthru
          _
        // Predicated region
        $region41: #{tpu_custom_call.1} parent=11 // pred_check
          %p371 = pneg %p243
        $region42: #{tpu_custom_call.1} parent=11 // pred_check_branch
          %373 = sbr.rel (%p371) target = $region44
        $region43: #{tpu_custom_call.1} parent=11 // pred_region
          _
        $region44: #{tpu_custom_call.1} parent=11 // pred_fallthru
          _
        // Predicated region
        $region45: #{tpu_custom_call.1} parent=11 // pred_check
          %p374 = pneg %p264
        $region46: #{tpu_custom_call.1} parent=11 // pred_check_branch
          %376 = sbr.rel (%p374) target = $region48
        $region47: #{tpu_custom_call.1} parent=11 // pred_region
          _
        $region48: #{tpu_custom_call.1} parent=11 // pred_fallthru
          _
        // Predicated region
        $region49: #{tpu_custom_call.1} parent=11 // pred_check
          %p377 = pneg %p285
        $region50: #{tpu_custom_call.1} parent=11 // pred_check_branch
          %379 = sbr.rel (%p377) target = $region52
        $region51: #{tpu_custom_call.1} parent=11 // pred_region
          _
        $region52: #{tpu_custom_call.1} parent=11 // pred_fallthru
          _
      $region12: #{tpu_custom_call.1} parent=5 // pred_fallthru
        _
      %p380 = scmp.lt.s32.totalorder %s23, 2
      // Predicated region
      $region53: #{tpu_custom_call.1} parent=5 // pred_check
        %p381 = pneg %p380
      $region54: #{tpu_custom_call.1} parent=5 // pred_check_branch
        %383 = sbr.rel (%p381) target = $region56
      $region55: #{tpu_custom_call.1} parent=5 // pred_region
        // Predicated region
        $region57: #{tpu_custom_call.1} parent=55 // pred_check
          %p384 = pneg %p106
        $region58: #{tpu_custom_call.1} parent=55 // pred_check_branch
          %386 = sbr.rel (%p384) target = $region60
        $region59: #{tpu_custom_call.1} parent=55 // pred_region
          %p387 = scmp.lt.s32.totalorder %s23, 1
          %s388 = scalar_select %p387, %s23, 1
          %s389 = smul.addr %s388, 8
          %s390 = scalar_lea.vmem %s3, %s389
        $region60: #{tpu_custom_call.1} parent=55 // pred_fallthru
          _
        // Predicated region
        $region61: #{tpu_custom_call.1} parent=55 // pred_check
          %p391 = pneg %p132
        $region62: #{tpu_custom_call.1} parent=55 // pred_check_branch
          %393 = sbr.rel (%p391) target = $region64
        $region63: #{tpu_custom_call.1} parent=55 // pred_region
          %p394 = scmp.lt.s32.totalorder %s23, 1
          %s395 = scalar_select %p394, %s23, 1
          %s396 = smul.addr %s395, 8
          %s397 = scalar_lea.vmem %s4, %s396
        $region64: #{tpu_custom_call.1} parent=55 // pred_fallthru
          _
      $region56: #{tpu_custom_call.1} parent=5 // pred_fallthru
        _
      %p398 = scmp.le.s32.totalorder 1, %s23
      %p399 = scmp.lt.s32.totalorder %s23, 3
      %p400 = pnand %p398, %p399
      %p401 = pneg %p400
      // Predicated region
      $region65: #{tpu_custom_call.1} parent=5 // pred_check
        _
      $region66: #{tpu_custom_call.1} parent=5 // pred_check_branch
        %403 = sbr.rel (%p400) target = $region68
      $region67: #{tpu_custom_call.1} parent=5 // pred_region
        %s404 = ssub.s32 %s23, 1
        // Predicated region
        $region69: #{tpu_custom_call.1} parent=67 // pred_check
          %p405 = pneg %p44
        $region70: #{tpu_custom_call.1} parent=67 // pred_check_branch
          %407 = sbr.rel (%p405) target = $region72
        $region71: #{tpu_custom_call.1} parent=67 // pred_region
          %408 = dma.done [#allocation4], 16
        $region72: #{tpu_custom_call.1} parent=67 // pred_fallthru
          _
        // Predicated region
        $region73: #{tpu_custom_call.1} parent=67 // pred_check
          %p409 = pneg %p65
        $region74: #{tpu_custom_call.1} parent=67 // pred_check_branch
          %411 = sbr.rel (%p409) target = $region76
        $region75: #{tpu_custom_call.1} parent=67 // pred_region
          %412 = dma.done [#allocation6], 16
        $region76: #{tpu_custom_call.1} parent=67 // pred_fallthru
          _
        // Predicated region
        $region77: #{tpu_custom_call.1} parent=67 // pred_check
          %p413 = pneg %p86
        $region78: #{tpu_custom_call.1} parent=67 // pred_check_branch
          %415 = sbr.rel (%p413) target = $region80
        $region79: #{tpu_custom_call.1} parent=67 // pred_region
          %416 = dma.done [#allocation6], 16
        $region80: #{tpu_custom_call.1} parent=67 // pred_fallthru
          _
        %417 = sfence
        %p418 = pneg %p44
        %p419 = pneg %p41
        %p420 = pneg %p65
        %p421 = pneg %p62
        %p422 = pneg %p86
        %p423 = pneg %p83
        %p424 = scmp.lt.s32.totalorder %s28, 1
        %s425 = scalar_select %p424, %s28, 1
        %s426 = smul.addr %s425, 8
        %s427 = scalar_lea.vmem %s3, %s426
        %p428 = pneg %p112
        %p429 = pneg %p109
        %p430 = scmp.lt.s32.totalorder %s28, 1
        %s431 = scalar_select %p430, %s28, 1
        %s432 = smul.addr %s431, 8
        %s433 = scalar_lea.vmem %s4, %s432
        %p434 = pneg %p138
        %p435 = pneg %p135
        %p436 = pneg %p159
        %p437 = pneg %p156
        %p438 = pneg %p180
        %p439 = pneg %p177
        %p440 = pneg %p201
        %p441 = pneg %p198
        %p442 = pneg %p222
        %p443 = pneg %p219
        %p444 = pneg %p243
        %p445 = pneg %p240
        %p446 = pneg %p264
        %p447 = pneg %p261
        %p448 = pneg %p285
        %p449 = pneg %p282
        %p450 = pneg %p311
        %p451 = pneg %p308
        %s452 = sand.u32 %s298, 1
        %s453 = scalar_lea.sflag [#allocation3], %s452
        %s454 = sand.u32 %s298, 1
        %s455 = smul.addr %s454, 8
        %s456 = scalar_lea.vmem [#allocation8], %s455
        %p457 = scmp.lt.s32.totalorder %s28, 1
        %s458 = scalar_select %p457, %s28, 1
        %s459 = smul.addr %s458, 8
        %s460 = scalar_lea.vmem %s3, %s459
        %p461 = scmp.lt.s32.totalorder %s28, 1
        %s462 = scalar_select %p461, %s28, 1
        %s463 = smul.addr %s462, 8
        %s464 = scalar_lea.vmem %s4, %s463
        %v465 = vld [vmem:[%s464] sm:$0xff]
        %v466 = vld [vmem:[%s460] sm:$0xff]
        %468 = vset.pattern.permute.xlu0 0
        %469 = vperm.xlu0 %468, %v465
        %v470 = vpop.permute.xlu0 %469
        %v472 = vmul.f32 %v466, %v470
        %v473 = vld [vmem:[%s5] sm:$0xff]
        %v474 = vld [vmem:[%s5 + $0x8] sm:$0xff]
        %v475 = vld [vmem:[%s5 + $0x10] sm:$0xff]
        %v476 = vld [vmem:[%s5 + $0x18] sm:$0xff]
        %vm477 = vcmask 261120
        %v479 = vsel %vm477, %v472, 0
        %481 = vmatprep.subr.mxu0 0.0
        %482 = vmatpush1.msra.mxu0 0.0
        %483 = vmatprep.subr.mxu0 0.0
        %484 = vmatpush1.msra.mxu0 0.0
        %485 = vmatprep.subr.mxu0 0.0
        %486 = vmatpush1.msra.mxu0 0.0
        %487 = vmatprep.subr.mxu0 0.0
        %488 = vmatpush1.msra.mxu0 0.0
        %489 = vmatprep.subr.mxu0 0.0
        %490 = vmatpush1.msra.mxu0 0.0
        %491 = vmatprep.subr.mxu0 0.0
        %492 = vmatpush1.msra.mxu0 0.0
        %493 = vmatprep.subr.mxu0 0.0
        %494 = vmatpush1.msra.mxu0 0.0
        %495 = vmatprep.subr.mxu0 0.0
        %496 = vmatpush1.msra.mxu0 0.0
        %497 = vmatprep.subr.mxu0 0.0
        %498 = vmatpush1.msra.mxu0 0.0
        %499 = vmatprep.subr.mxu0 0.0
        %500 = vmatpush1.msra.mxu0 0.0
        %501 = vmatprep.subr.mxu0 0.0
        %502 = vmatpush1.msra.mxu0 0.0
        %503 = vmatprep.subr.mxu0 0.0
        %504 = vmatpush1.msra.mxu0 0.0
        %505 = vmatprep.subr.mxu0 0.0
        %506 = vmatpush1.msra.mxu0 %v476
        %507 = vmatprep.subr.mxu0 0.0
        %508 = vmatpush1.msra.mxu0 %v475
        %509 = vmatprep.subr.mxu0 0.0
        %510 = vmatpush1.msra.mxu0 %v474
        %511 = vmatprep.subr.mxu0 0.0
        %512 = vmatpush1.msra.mxu0 %v473
        %513 = vmatprep.subr.mxu0 0.0
        %514 = vmatpush2.msra.mxu0 0.0
        %515 = vmatprep.subr.mxu0 0.0
        %516 = vmatpush2.msra.mxu0 0.0
        %517 = vmatprep.subr.mxu0 0.0
        %518 = vmatpush2.msra.mxu0 0.0
        %519 = vmatprep.subr.mxu0 0.0
        %520 = vmatpush2.msra.mxu0 0.0
        %521 = vmatprep.subr.mxu0 0.0
        %522 = vmatpush2.msra.mxu0 0.0
        %523 = vmatprep.subr.mxu0 0.0
        %524 = vmatpush2.msra.mxu0 0.0
        %525 = vmatprep.subr.mxu0 0.0
        %526 = vmatpush2.msra.mxu0 0.0
        %527 = vmatprep.subr.mxu0 0.0
        %528 = vmatpush2.msra.mxu0 0.0
        %529 = vmatprep.subr.mxu0 0.0
        %530 = vmatpush2.msra.mxu0 0.0
        %531 = vmatprep.subr.mxu0 0.0
        %532 = vmatpush2.msra.mxu0 0.0
        %533 = vmatprep.subr.mxu0 0.0
        %534 = vmatpush2.msra.mxu0 0.0
        %535 = vmatprep.subr.mxu0 0.0
        %536 = vmatpush2.msra.mxu0 0.0
        %537 = vmatprep.subr.mxu0 0.0
        %538 = vmatpush2.msra.mxu0 0.0
        %539 = vmatprep.subr.mxu0 0.0
        %540 = vmatpush2.msra.mxu0 0.0
        %541 = vmatprep.subr.mxu0 0.0
        %542 = vmatpush2.msra.mxu0 0.0
        %543 = vmatprep.subr.mxu0 0.0
        %544 = vmatpush2.msra.mxu0 0.0
        %545 = vmatprep.mubr.f32.mxu0 0.0
        %546 = vmatmul.mubr.f32.gmra.mxu0 %v479
        %v547 = vpop.f32.mrf.mxu0
        %v548 = vadd.f32 0.0, %v547
        %v549 = vpop.f32.mrf.mxu0
        %550 = vdwg.mxu0
        %v551 = vld [vmem:[%s6] sm:$0xff]
        %v552 = vld [vmem:[%s6 + $0x8] sm:$0xff]
        %v553 = vld [vmem:[%s6 + $0x10] sm:$0xff]
        %v554 = vld [vmem:[%s6 + $0x18] sm:$0xff]
        %555 = vmatprep.subr.mxu0 0.0
        %556 = vmatpush1.msra.mxu0 0.0
        %557 = vmatprep.subr.mxu0 0.0
        %558 = vmatpush1.msra.mxu0 0.0
        %559 = vmatprep.subr.mxu0 0.0
        %560 = vmatpush1.msra.mxu0 0.0
        %561 = vmatprep.subr.mxu0 0.0
        %562 = vmatpush1.msra.mxu0 0.0
        %563 = vmatprep.subr.mxu0 0.0
        %564 = vmatpush1.msra.mxu0 0.0
        %565 = vmatprep.subr.mxu0 0.0
        %566 = vmatpush1.msra.mxu0 0.0
        %567 = vmatprep.subr.mxu0 0.0
        %568 = vmatpush1.msra.mxu0 0.0
        %569 = vmatprep.subr.mxu0 0.0
        %570 = vmatpush1.msra.mxu0 0.0
        %571 = vmatprep.subr.mxu0 0.0
        %572 = vmatpush1.msra.mxu0 0.0
        %573 = vmatprep.subr.mxu0 0.0
        %574 = vmatpush1.msra.mxu0 0.0
        %575 = vmatprep.subr.mxu0 0.0
        %576 = vmatpush1.msra.mxu0 0.0
        %577 = vmatprep.subr.mxu0 0.0
        %578 = vmatpush1.msra.mxu0 0.0
        %579 = vmatprep.subr.mxu0 0.0
        %580 = vmatpush1.msra.mxu0 %v554
        %581 = vmatprep.subr.mxu0 0.0
        %582 = vmatpush1.msra.mxu0 %v553
        %583 = vmatprep.subr.mxu0 0.0
        %584 = vmatpush1.msra.mxu0 %v552
        %585 = vmatprep.subr.mxu0 0.0
        %586 = vmatpush1.msra.mxu0 %v551
        %587 = vmatprep.subr.mxu0 0.0
        %588 = vmatpush2.msra.mxu0 0.0
        %589 = vmatprep.subr.mxu0 0.0
        %590 = vmatpush2.msra.mxu0 0.0
        %591 = vmatprep.subr.mxu0 0.0
        %592 = vmatpush2.msra.mxu0 0.0
        %593 = vmatprep.subr.mxu0 0.0
        %594 = vmatpush2.msra.mxu0 0.0
        %595 = vmatprep.subr.mxu0 0.0
        %596 = vmatpush2.msra.mxu0 0.0
        %597 = vmatprep.subr.mxu0 0.0
        %598 = vmatpush2.msra.mxu0 0.0
        %599 = vmatprep.subr.mxu0 0.0
        %600 = vmatpush2.msra.mxu0 0.0
        %601 = vmatprep.subr.mxu0 0.0
        %602 = vmatpush2.msra.mxu0 0.0
        %603 = vmatprep.subr.mxu0 0.0
        %604 = vmatpush2.msra.mxu0 0.0
        %605 = vmatprep.subr.mxu0 0.0
        %606 = vmatpush2.msra.mxu0 0.0
        %607 = vmatprep.subr.mxu0 0.0
        %608 = vmatpush2.msra.mxu0 0.0
        %609 = vmatprep.subr.mxu0 0.0
        %610 = vmatpush2.msra.mxu0 0.0
        %611 = vmatprep.subr.mxu0 0.0
        %612 = vmatpush2.msra.mxu0 0.0
        %613 = vmatprep.subr.mxu0 0.0
        %614 = vmatpush2.msra.mxu0 0.0
        %615 = vmatprep.subr.mxu0 0.0
        %616 = vmatpush2.msra.mxu0 0.0
        %617 = vmatprep.subr.mxu0 0.0
        %618 = vmatpush2.msra.mxu0 0.0
        %619 = vmatprep.mubr.f32.mxu0 0.0
        %620 = vmatmul.mubr.f32.gmra.mxu0 %v479
        %v621 = vpop.f32.mrf.mxu0
        %v622 = vadd.f32 0.0, %v621
        %v623 = vpop.f32.mrf.mxu0
        %624 = vdwg.mxu0
        %v625 = vld [vmem:[%s7] sm:$0xf]
        %v627 = vsel %vm477, %v625, 0
        %629 = vmatprep.subr.mxu0 0.0
        %630 = vmatpush1.xpose.msra.mxu0 0.0
        %631 = vmatprep.subr.mxu0 0.0
        %632 = vmatpush1.xpose.msra.mxu0 0.0
        %633 = vmatprep.subr.mxu0 0.0
        %634 = vmatpush1.xpose.msra.mxu0 0.0
        %635 = vmatprep.subr.mxu0 0.0
        %636 = vmatpush1.xpose.msra.mxu0 0.0
        %637 = vmatprep.subr.mxu0 0.0
        %638 = vmatpush1.xpose.msra.mxu0 0.0
        %639 = vmatprep.subr.mxu0 0.0
        %640 = vmatpush1.xpose.msra.mxu0 0.0
        %641 = vmatprep.subr.mxu0 0.0
        %642 = vmatpush1.xpose.msra.mxu0 0.0
        %643 = vmatprep.subr.mxu0 0.0
        %644 = vmatpush1.xpose.msra.mxu0 0.0
        %645 = vmatprep.subr.mxu0 0.0
        %646 = vmatpush1.xpose.msra.mxu0 0.0
        %647 = vmatprep.subr.mxu0 0.0
        %648 = vmatpush1.xpose.msra.mxu0 0.0
        %649 = vmatprep.subr.mxu0 0.0
        %650 = vmatpush1.xpose.msra.mxu0 0.0
        %651 = vmatprep.subr.mxu0 0.0
        %652 = vmatpush1.xpose.msra.mxu0 0.0
        %653 = vmatprep.subr.mxu0 0.0
        %654 = vmatpush1.xpose.msra.mxu0 0.0
        %655 = vmatprep.subr.mxu0 0.0
        %656 = vmatpush1.xpose.msra.mxu0 0.0
        %657 = vmatprep.subr.mxu0 0.0
        %658 = vmatpush1.xpose.msra.mxu0 0.0
        %659 = vmatprep.subr.mxu0 0.0
        %660 = vmatpush1.xpose.msra.mxu0 %v479
        %661 = vmatprep.subr.mxu0 0.0
        %662 = vmatpush2.xpose.msra.mxu0 0.0
        %663 = vmatprep.subr.mxu0 0.0
        %664 = vmatpush2.xpose.msra.mxu0 0.0
        %665 = vmatprep.subr.mxu0 0.0
        %666 = vmatpush2.xpose.msra.mxu0 0.0
        %667 = vmatprep.subr.mxu0 0.0
        %668 = vmatpush2.xpose.msra.mxu0 0.0
        %669 = vmatprep.subr.mxu0 0.0
        %670 = vmatpush2.xpose.msra.mxu0 0.0
        %671 = vmatprep.subr.mxu0 0.0
        %672 = vmatpush2.xpose.msra.mxu0 0.0
        %673 = vmatprep.subr.mxu0 0.0
        %674 = vmatpush2.xpose.msra.mxu0 0.0
        %675 = vmatprep.subr.mxu0 0.0
        %676 = vmatpush2.xpose.msra.mxu0 0.0
        %677 = vmatprep.subr.mxu0 0.0
        %678 = vmatpush2.xpose.msra.mxu0 0.0
        %679 = vmatprep.subr.mxu0 0.0
        %680 = vmatpush2.xpose.msra.mxu0 0.0
        %681 = vmatprep.subr.mxu0 0.0
        %682 = vmatpush2.xpose.msra.mxu0 0.0
        %683 = vmatprep.subr.mxu0 0.0
        %684 = vmatpush2.xpose.msra.mxu0 0.0
        %685 = vmatprep.subr.mxu0 0.0
        %686 = vmatpush2.xpose.msra.mxu0 0.0
        %687 = vmatprep.subr.mxu0 0.0
        %688 = vmatpush2.xpose.msra.mxu0 0.0
        %689 = vmatprep.subr.mxu0 0.0
        %690 = vmatpush2.xpose.msra.mxu0 0.0
        %691 = vmatprep.subr.mxu0 0.0
        %692 = vmatpush2.xpose.msra.mxu0 0.0
        %693 = vmatprep.mubr.f32.mxu0 0.0
        %694 = vmatmul.mubr.f32.gmra.mxu0 %v627
        %v695 = vpop.f32.mrf.mxu0
        %v696 = vadd.f32 0.0, %v695
        %v697 = vpop.f32.mrf.mxu0
        %698 = vdwg.mxu0
        %v699 = vlaneseq
        %v700 = vshrl.u32 %v699, 7
        %v701 = vlaneseq
        %v702 = vand.u32 %v701, 127
        %vm703 = vcmp.ge.s32.totalorder %v700, %v702
        %v704 = vsel %vm703, 1, 0
        %v705 = vcvt.s32.f32 %v704
        %v706 = vld [vmem:[%s8 + $0x3] sm:$0x1]
        %v707 = vlaneseq
        %v708 = vshrl.u32 %v707, 7
        %v709 = vsub.s32 0, %v708
        %v710 = vrot.slane %v706, %v709
        %v711 = vmul.f32 %v622, %v710
        %v712 = vsub.s32 %v700, %v702
        %vm713 = vcmp.eq.s32.totalorder %v712, 3
        %v714 = vsel %vm713, 1, 0
        %v715 = vcvt.s32.f32 %v714
        %vm716 = vcmask 64512
        %v718 = vsel %vm716, %v715, 0
        %720 = vmatprep.subr.mxu0 0.0
        %721 = vmatpush1.msra.mxu0 0.0
        %722 = vmatprep.subr.mxu0 0.0
        %723 = vmatpush1.msra.mxu0 0.0
        %724 = vmatprep.subr.mxu0 0.0
        %725 = vmatpush1.msra.mxu0 0.0
        %726 = vmatprep.subr.mxu0 0.0
        %727 = vmatpush1.msra.mxu0 0.0
        %728 = vmatprep.subr.mxu0 0.0
        %729 = vmatpush1.msra.mxu0 0.0
        %730 = vmatprep.subr.mxu0 0.0
        %731 = vmatpush1.msra.mxu0 0.0
        %732 = vmatprep.subr.mxu0 0.0
        %733 = vmatpush1.msra.mxu0 0.0
        %734 = vmatprep.subr.mxu0 0.0
        %735 = vmatpush1.msra.mxu0 0.0
        %736 = vmatprep.subr.mxu0 0.0
        %737 = vmatpush1.msra.mxu0 0.0
        %738 = vmatprep.subr.mxu0 0.0
        %739 = vmatpush1.msra.mxu0 0.0
        %740 = vmatprep.subr.mxu0 0.0
        %741 = vmatpush1.msra.mxu0 0.0
        %742 = vmatprep.subr.mxu0 0.0
        %743 = vmatpush1.msra.mxu0 0.0
        %744 = vmatprep.subr.mxu0 0.0
        %745 = vmatpush1.msra.mxu0 0.0
        %746 = vmatprep.subr.mxu0 0.0
        %747 = vmatpush1.msra.mxu0 0.0
        %748 = vmatprep.subr.mxu0 0.0
        %749 = vmatpush1.msra.mxu0 0.0
        %750 = vmatprep.subr.mxu0 0.0
        %751 = vmatpush1.msra.mxu0 %v622
        %752 = vmatprep.subr.mxu0 0.0
        %753 = vmatpush2.msra.mxu0 0.0
        %754 = vmatprep.subr.mxu0 0.0
        %755 = vmatpush2.msra.mxu0 0.0
        %756 = vmatprep.subr.mxu0 0.0
        %757 = vmatpush2.msra.mxu0 0.0
        %758 = vmatprep.subr.mxu0 0.0
        %759 = vmatpush2.msra.mxu0 0.0
        %760 = vmatprep.subr.mxu0 0.0
        %761 = vmatpush2.msra.mxu0 0.0
        %762 = vmatprep.subr.mxu0 0.0
        %763 = vmatpush2.msra.mxu0 0.0
        %764 = vmatprep.subr.mxu0 0.0
        %765 = vmatpush2.msra.mxu0 0.0
        %766 = vmatprep.subr.mxu0 0.0
        %767 = vmatpush2.msra.mxu0 0.0
        %768 = vmatprep.subr.mxu0 0.0
        %769 = vmatpush2.msra.mxu0 0.0
        %770 = vmatprep.subr.mxu0 0.0
        %771 = vmatpush2.msra.mxu0 0.0
        %772 = vmatprep.subr.mxu0 0.0
        %773 = vmatpush2.msra.mxu0 0.0
        %774 = vmatprep.subr.mxu0 0.0
        %775 = vmatpush2.msra.mxu0 0.0
        %776 = vmatprep.subr.mxu0 0.0
        %777 = vmatpush2.msra.mxu0 0.0
        %778 = vmatprep.subr.mxu0 0.0
        %779 = vmatpush2.msra.mxu0 0.0
        %780 = vmatprep.subr.mxu0 0.0
        %781 = vmatpush2.msra.mxu0 0.0
        %782 = vmatprep.subr.mxu0 0.0
        %783 = vmatpush2.msra.mxu0 0.0
        %784 = vmatprep.mubr.f32.mxu0 0.0
        %785 = vmatmul.mubr.f32.gmra.mxu0 %v718
        %v786 = vpop.f32.mrf.mxu0
        %v787 = vadd.f32 0.0, %v786
        %v788 = vpop.f32.mrf.mxu0
        %789 = vdwg.mxu0
        %v790 = vld [vmem:[%s8] sm:$0x1]
        %v791 = vlaneseq
        %v792 = vshrl.u32 %v791, 7
        %v793 = vsub.s32 0, %v792
        %v794 = vrot.slane %v790, %v793
        %v795 = vmul.f32 %v787, %v794
        %v796 = vadd.f32 %v711, %v795
        %vm797 = vcmp.eq.s32.totalorder %v712, 2
        %v798 = vsel %vm797, 1, 0
        %v799 = vcvt.s32.f32 %v798
        %v801 = vsel %vm716, %v799, 0
        %803 = vmatprep.subr.mxu0 0.0
        %804 = vmatpush1.msra.mxu0 0.0
        %805 = vmatprep.subr.mxu0 0.0
        %806 = vmatpush1.msra.mxu0 0.0
        %807 = vmatprep.subr.mxu0 0.0
        %808 = vmatpush1.msra.mxu0 0.0
        %809 = vmatprep.subr.mxu0 0.0
        %810 = vmatpush1.msra.mxu0 0.0
        %811 = vmatprep.subr.mxu0 0.0
        %812 = vmatpush1.msra.mxu0 0.0
        %813 = vmatprep.subr.mxu0 0.0
        %814 = vmatpush1.msra.mxu0 0.0
        %815 = vmatprep.subr.mxu0 0.0
        %816 = vmatpush1.msra.mxu0 0.0
        %817 = vmatprep.subr.mxu0 0.0
        %818 = vmatpush1.msra.mxu0 0.0
        %819 = vmatprep.subr.mxu0 0.0
        %820 = vmatpush1.msra.mxu0 0.0
        %821 = vmatprep.subr.mxu0 0.0
        %822 = vmatpush1.msra.mxu0 0.0
        %823 = vmatprep.subr.mxu0 0.0
        %824 = vmatpush1.msra.mxu0 0.0
        %825 = vmatprep.subr.mxu0 0.0
        %826 = vmatpush1.msra.mxu0 0.0
        %827 = vmatprep.subr.mxu0 0.0
        %828 = vmatpush1.msra.mxu0 0.0
        %829 = vmatprep.subr.mxu0 0.0
        %830 = vmatpush1.msra.mxu0 0.0
        %831 = vmatprep.subr.mxu0 0.0
        %832 = vmatpush1.msra.mxu0 0.0
        %833 = vmatprep.subr.mxu0 0.0
        %834 = vmatpush1.msra.mxu0 %v622
        %835 = vmatprep.subr.mxu0 0.0
        %836 = vmatpush2.msra.mxu0 0.0
        %837 = vmatprep.subr.mxu0 0.0
        %838 = vmatpush2.msra.mxu0 0.0
        %839 = vmatprep.subr.mxu0 0.0
        %840 = vmatpush2.msra.mxu0 0.0
        %841 = vmatprep.subr.mxu0 0.0
        %842 = vmatpush2.msra.mxu0 0.0
        %843 = vmatprep.subr.mxu0 0.0
        %844 = vmatpush2.msra.mxu0 0.0
        %845 = vmatprep.subr.mxu0 0.0
        %846 = vmatpush2.msra.mxu0 0.0
        %847 = vmatprep.subr.mxu0 0.0
        %848 = vmatpush2.msra.mxu0 0.0
        %849 = vmatprep.subr.mxu0 0.0
        %850 = vmatpush2.msra.mxu0 0.0
        %851 = vmatprep.subr.mxu0 0.0
        %852 = vmatpush2.msra.mxu0 0.0
        %853 = vmatprep.subr.mxu0 0.0
        %854 = vmatpush2.msra.mxu0 0.0
        %855 = vmatprep.subr.mxu0 0.0
        %856 = vmatpush2.msra.mxu0 0.0
        %857 = vmatprep.subr.mxu0 0.0
        %858 = vmatpush2.msra.mxu0 0.0
        %859 = vmatprep.subr.mxu0 0.0
        %860 = vmatpush2.msra.mxu0 0.0
        %861 = vmatprep.subr.mxu0 0.0
        %862 = vmatpush2.msra.mxu0 0.0
        %863 = vmatprep.subr.mxu0 0.0
        %864 = vmatpush2.msra.mxu0 0.0
        %865 = vmatprep.subr.mxu0 0.0
        %866 = vmatpush2.msra.mxu0 0.0
        %867 = vmatprep.mubr.f32.mxu0 0.0
        %868 = vmatmul.mubr.f32.gmra.mxu0 %v801
        %v869 = vpop.f32.mrf.mxu0
        %v870 = vadd.f32 0.0, %v869
        %v871 = vpop.f32.mrf.mxu0
        %872 = vdwg.mxu0
        %v873 = vld [vmem:[%s8 + $0x1] sm:$0x1]
        %v874 = vlaneseq
        %v875 = vshrl.u32 %v874, 7
        %v876 = vsub.s32 0, %v875
        %v877 = vrot.slane %v873, %v876
        %v878 = vmul.f32 %v870, %v877
        %v879 = vadd.f32 %v796, %v878
        %vm880 = vcmp.eq.s32.totalorder %v712, 1
        %v881 = vsel %vm880, 1, 0
        %v882 = vcvt.s32.f32 %v881
        %v884 = vsel %vm716, %v882, 0
        %886 = vmatprep.subr.mxu0 0.0
        %887 = vmatpush1.msra.mxu0 0.0
        %888 = vmatprep.subr.mxu0 0.0
        %889 = vmatpush1.msra.mxu0 0.0
        %890 = vmatprep.subr.mxu0 0.0
        %891 = vmatpush1.msra.mxu0 0.0
        %892 = vmatprep.subr.mxu0 0.0
        %893 = vmatpush1.msra.mxu0 0.0
        %894 = vmatprep.subr.mxu0 0.0
        %895 = vmatpush1.msra.mxu0 0.0
        %896 = vmatprep.subr.mxu0 0.0
        %897 = vmatpush1.msra.mxu0 0.0
        %898 = vmatprep.subr.mxu0 0.0
        %899 = vmatpush1.msra.mxu0 0.0
        %900 = vmatprep.subr.mxu0 0.0
        %901 = vmatpush1.msra.mxu0 0.0
        %902 = vmatprep.subr.mxu0 0.0
        %903 = vmatpush1.msra.mxu0 0.0
        %904 = vmatprep.subr.mxu0 0.0
        %905 = vmatpush1.msra.mxu0 0.0
        %906 = vmatprep.subr.mxu0 0.0
        %907 = vmatpush1.msra.mxu0 0.0
        %908 = vmatprep.subr.mxu0 0.0
        %909 = vmatpush1.msra.mxu0 0.0
        %910 = vmatprep.subr.mxu0 0.0
        %911 = vmatpush1.msra.mxu0 0.0
        %912 = vmatprep.subr.mxu0 0.0
        %913 = vmatpush1.msra.mxu0 0.0
        %914 = vmatprep.subr.mxu0 0.0
        %915 = vmatpush1.msra.mxu0 0.0
        %916 = vmatprep.subr.mxu0 0.0
        %917 = vmatpush1.msra.mxu0 %v622
        %918 = vmatprep.subr.mxu0 0.0
        %919 = vmatpush2.msra.mxu0 0.0
        %920 = vmatprep.subr.mxu0 0.0
        %921 = vmatpush2.msra.mxu0 0.0
        %922 = vmatprep.subr.mxu0 0.0
        %923 = vmatpush2.msra.mxu0 0.0
        %924 = vmatprep.subr.mxu0 0.0
        %925 = vmatpush2.msra.mxu0 0.0
        %926 = vmatprep.subr.mxu0 0.0
        %927 = vmatpush2.msra.mxu0 0.0
        %928 = vmatprep.subr.mxu0 0.0
        %929 = vmatpush2.msra.mxu0 0.0
        %930 = vmatprep.subr.mxu0 0.0
        %931 = vmatpush2.msra.mxu0 0.0
        %932 = vmatprep.subr.mxu0 0.0
        %933 = vmatpush2.msra.mxu0 0.0
        %934 = vmatprep.subr.mxu0 0.0
        %935 = vmatpush2.msra.mxu0 0.0
        %936 = vmatprep.subr.mxu0 0.0
        %937 = vmatpush2.msra.mxu0 0.0
        %938 = vmatprep.subr.mxu0 0.0
        %939 = vmatpush2.msra.mxu0 0.0
        %940 = vmatprep.subr.mxu0 0.0
        %941 = vmatpush2.msra.mxu0 0.0
        %942 = vmatprep.subr.mxu0 0.0
        %943 = vmatpush2.msra.mxu0 0.0
        %944 = vmatprep.subr.mxu0 0.0
        %945 = vmatpush2.msra.mxu0 0.0
        %946 = vmatprep.subr.mxu0 0.0
        %947 = vmatpush2.msra.mxu0 0.0
        %948 = vmatprep.subr.mxu0 0.0
        %949 = vmatpush2.msra.mxu0 0.0
        %950 = vmatprep.mubr.f32.mxu0 0.0
        %951 = vmatmul.mubr.f32.gmra.mxu0 %v884
        %v952 = vpop.f32.mrf.mxu0
        %v953 = vadd.f32 0.0, %v952
        %v954 = vpop.f32.mrf.mxu0
        %955 = vdwg.mxu0
        %v956 = vld [vmem:[%s8 + $0x2] sm:$0x1]
        %v957 = vlaneseq
        %v958 = vshrl.u32 %v957, 7
        %v959 = vsub.s32 0, %v958
        %v960 = vrot.slane %v956, %v959
        %v961 = vmul.f32 %v953, %v960
        %v962 = vadd.f32 %v879, %v961
        %v963 = vld [vmem:[%s9] sm:$0x1]
        %v965 = vlaneseq
        %v966 = vshrl.u32 %v965, 7
        %v967 = vsub.s32 0, %v966
        %v968 = vrot.slane %v963, %v967
        %v970 = vadd.f32 %v962, %v968
        %v971 = vxor.u32 %v970, 2147483648
        %v972 = vmul.f32 %v971, 1.442695
        %v973 = vpow.pop %v972
        %v974 = vadd.f32 %v973, 1.0
        %v975 = vrcp.pop %v974
        %v976 = vmul.f32 1.0, %v975
        %v977 = vmul.f32 %v970, %v976
        %v978 = vmul.f32 %v977, %v470
        %980 = vrot.lane.b32.xlu0 %v978, 48
        %v981 = vpop.permute.xlu0 %980
        %982 = vrot.lane.b32.xlu0 %v978, 64
        %v983 = vpop.permute.xlu0 %982
        %vm984 = vcmask 130048
        %v985 = vsel %vm984, %v981, 0
        %v987 = vsel %vm984, %v983, 0
        %989 = vmatprep.subr.mxu0 0.0
        %990 = vmatpush1.xpose.msra.mxu0 0.0
        %991 = vmatprep.subr.mxu0 0.0
        %992 = vmatpush1.xpose.msra.mxu0 0.0
        %993 = vmatprep.subr.mxu0 0.0
        %994 = vmatpush1.xpose.msra.mxu0 0.0
        %995 = vmatprep.subr.mxu0 0.0
        %996 = vmatpush1.xpose.msra.mxu0 0.0
        %997 = vmatprep.subr.mxu0 0.0
        %998 = vmatpush1.xpose.msra.mxu0 0.0
        %999 = vmatprep.subr.mxu0 0.0
        %1000 = vmatpush1.xpose.msra.mxu0 0.0
        %1001 = vmatprep.subr.mxu0 0.0
        %1002 = vmatpush1.xpose.msra.mxu0 0.0
        %1003 = vmatprep.subr.mxu0 0.0
        %1004 = vmatpush1.xpose.msra.mxu0 0.0
        %1005 = vmatprep.subr.mxu0 0.0
        %1006 = vmatpush1.xpose.msra.mxu0 0.0
        %1007 = vmatprep.subr.mxu0 0.0
        %1008 = vmatpush1.xpose.msra.mxu0 0.0
        %1009 = vmatprep.subr.mxu0 0.0
        %1010 = vmatpush1.xpose.msra.mxu0 0.0
        %1011 = vmatprep.subr.mxu0 0.0
        %1012 = vmatpush1.xpose.msra.mxu0 0.0
        %1013 = vmatprep.subr.mxu0 0.0
        %1014 = vmatpush1.xpose.msra.mxu0 0.0
        %1015 = vmatprep.subr.mxu0 0.0
        %1016 = vmatpush1.xpose.msra.mxu0 0.0
        %1017 = vmatprep.subr.mxu0 0.0
        %1018 = vmatpush1.xpose.msra.mxu0 0.0
        %1019 = vmatprep.subr.mxu0 0.0
        %1020 = vmatpush1.xpose.msra.mxu0 %v987
        %1021 = vmatprep.subr.mxu0 0.0
        %1022 = vmatpush2.xpose.msra.mxu0 0.0
        %1023 = vmatprep.subr.mxu0 0.0
        %1024 = vmatpush2.xpose.msra.mxu0 0.0
        %1025 = vmatprep.subr.mxu0 0.0
        %1026 = vmatpush2.xpose.msra.mxu0 0.0
        %1027 = vmatprep.subr.mxu0 0.0
        %1028 = vmatpush2.xpose.msra.mxu0 0.0
        %1029 = vmatprep.subr.mxu0 0.0
        %1030 = vmatpush2.xpose.msra.mxu0 0.0
        %1031 = vmatprep.subr.mxu0 0.0
        %1032 = vmatpush2.xpose.msra.mxu0 0.0
        %1033 = vmatprep.subr.mxu0 0.0
        %1034 = vmatpush2.xpose.msra.mxu0 0.0
        %1035 = vmatprep.subr.mxu0 0.0
        %1036 = vmatpush2.xpose.msra.mxu0 0.0
        %1037 = vmatprep.subr.mxu0 0.0
        %1038 = vmatpush2.xpose.msra.mxu0 0.0
        %1039 = vmatprep.subr.mxu0 0.0
        %1040 = vmatpush2.xpose.msra.mxu0 0.0
        %1041 = vmatprep.subr.mxu0 0.0
        %1042 = vmatpush2.xpose.msra.mxu0 0.0
        %1043 = vmatprep.subr.mxu0 0.0
        %1044 = vmatpush2.xpose.msra.mxu0 0.0
        %1045 = vmatprep.subr.mxu0 0.0
        %1046 = vmatpush2.xpose.msra.mxu0 0.0
        %1047 = vmatprep.subr.mxu0 0.0
        %1048 = vmatpush2.xpose.msra.mxu0 0.0
        %1049 = vmatprep.subr.mxu0 0.0
        %1050 = vmatpush2.xpose.msra.mxu0 0.0
        %1051 = vmatprep.subr.mxu0 0.0
        %1052 = vmatpush2.xpose.msra.mxu0 0.0
        %1053 = vmatprep.mubr.f32.mxu0 0.0
        %1054 = vmatmul.mubr.f32.gmra.mxu0 %v985
        %v1055 = vpop.f32.mrf.mxu0
        %v1056 = vadd.f32 0.0, %v1055
        %v1057 = vpop.f32.mrf.mxu0
        %1058 = vdwg.mxu0
        %s1059 = sld [smem:[#allocation2]]
        %s1060 = sld [smem:[#allocation5]]
        %s1061 = sld [smem:[#allocation7]]
        %v1062 = vstv %s1061
        %v1063 = vadd.f32 %v696, %v1062
        %vm1064 = vcmp.gt.f32.partialorder %v1063, 20.0
        %v1065 = vmin.f32 %v1063, 20.0
        %v1066 = vmul.f32 %v1065, 1.442695
        %v1067 = vpow.pop %v1066
        %v1068 = vadd.f32 %v1067, 1.0
        %v1069 = vlog2.pop %v1068
        %v1070 = vmul.f32 %v1069, 0.6931472
        %v1071 = vmul.f32 -0.5, %v1067
        %v1072 = vadd.f32 %v1071, 1.0
        %v1073 = vmul.f32 %v1072, %v1067
        %v1074 = vand.u32 2147483647, %v1067
        %vm1075 = vcmp.lt.f32.partialorder %v1074, 0.0004427343
        %v1076 = vsel %vm1075, %v1073, %v1070
        %v1077 = vsel %vm1064, %v1063, %v1076
        %v1078 = vstv %s1059
        %v1079 = vmul.f32 %v1077, %v1078
        %v1080 = vlaneseq
        %v1081 = vshrl.u32 %v1080, 7
        %v1082 = vsub.s32 0, %v1081
        %v1083 = vrot.slane %v1079, %v1082
        %v1084 = vmul.f32 %v705, %v1083
        %v1085 = vsel %vm716, %v1084, 0.0
        %1086 = vadd.xlane.f32.xlu0 %v1085
        %v1087 = vpop.xlane.xlu0 %1086
        %v1089 = vsel %vm716, %v1079, 0
        %v1092 = vsel %vm716, %v705, 0
        %1094 = vmatprep.subr.mxu0 0.0
        %1095 = vmatpush1.xpose.msra.mxu0 0.0
        %1096 = vmatprep.subr.mxu0 0.0
        %1097 = vmatpush1.xpose.msra.mxu0 0.0
        %1098 = vmatprep.subr.mxu0 0.0
        %1099 = vmatpush1.xpose.msra.mxu0 0.0
        %1100 = vmatprep.subr.mxu0 0.0
        %1101 = vmatpush1.xpose.msra.mxu0 0.0
        %1102 = vmatprep.subr.mxu0 0.0
        %1103 = vmatpush1.xpose.msra.mxu0 0.0
        %1104 = vmatprep.subr.mxu0 0.0
        %1105 = vmatpush1.xpose.msra.mxu0 0.0
        %1106 = vmatprep.subr.mxu0 0.0
        %1107 = vmatpush1.xpose.msra.mxu0 0.0
        %1108 = vmatprep.subr.mxu0 0.0
        %1109 = vmatpush1.xpose.msra.mxu0 0.0
        %1110 = vmatprep.subr.mxu0 0.0
        %1111 = vmatpush1.xpose.msra.mxu0 0.0
        %1112 = vmatprep.subr.mxu0 0.0
        %1113 = vmatpush1.xpose.msra.mxu0 0.0
        %1114 = vmatprep.subr.mxu0 0.0
        %1115 = vmatpush1.xpose.msra.mxu0 0.0
        %1116 = vmatprep.subr.mxu0 0.0
        %1117 = vmatpush1.xpose.msra.mxu0 0.0
        %1118 = vmatprep.subr.mxu0 0.0
        %1119 = vmatpush1.xpose.msra.mxu0 0.0
        %1120 = vmatprep.subr.mxu0 0.0
        %1121 = vmatpush1.xpose.msra.mxu0 0.0
        %1122 = vmatprep.subr.mxu0 0.0
        %1123 = vmatpush1.xpose.msra.mxu0 0.0
        %1124 = vmatprep.subr.mxu0 0.0
        %1125 = vmatpush1.xpose.msra.mxu0 %v1092
        %1126 = vmatprep.subr.mxu0 0.0
        %1127 = vmatpush2.xpose.msra.mxu0 0.0
        %1128 = vmatprep.subr.mxu0 0.0
        %1129 = vmatpush2.xpose.msra.mxu0 0.0
        %1130 = vmatprep.subr.mxu0 0.0
        %1131 = vmatpush2.xpose.msra.mxu0 0.0
        %1132 = vmatprep.subr.mxu0 0.0
        %1133 = vmatpush2.xpose.msra.mxu0 0.0
        %1134 = vmatprep.subr.mxu0 0.0
        %1135 = vmatpush2.xpose.msra.mxu0 0.0
        %1136 = vmatprep.subr.mxu0 0.0
        %1137 = vmatpush2.xpose.msra.mxu0 0.0
        %1138 = vmatprep.subr.mxu0 0.0
        %1139 = vmatpush2.xpose.msra.mxu0 0.0
        %1140 = vmatprep.subr.mxu0 0.0
        %1141 = vmatpush2.xpose.msra.mxu0 0.0
        %1142 = vmatprep.subr.mxu0 0.0
        %1143 = vmatpush2.xpose.msra.mxu0 0.0
        %1144 = vmatprep.subr.mxu0 0.0
        %1145 = vmatpush2.xpose.msra.mxu0 0.0
        %1146 = vmatprep.subr.mxu0 0.0
        %1147 = vmatpush2.xpose.msra.mxu0 0.0
        %1148 = vmatprep.subr.mxu0 0.0
        %1149 = vmatpush2.xpose.msra.mxu0 0.0
        %1150 = vmatprep.subr.mxu0 0.0
        %1151 = vmatpush2.xpose.msra.mxu0 0.0
        %1152 = vmatprep.subr.mxu0 0.0
        %1153 = vmatpush2.xpose.msra.mxu0 0.0
        %1154 = vmatprep.subr.mxu0 0.0
        %1155 = vmatpush2.xpose.msra.mxu0 0.0
        %1156 = vmatprep.subr.mxu0 0.0
        %1157 = vmatpush2.xpose.msra.mxu0 0.0
        %1158 = vmatprep.mubr.f32.mxu0 0.0
        %1159 = vmatmul.mubr.f32.gmra.mxu0 %v1089
        %v1160 = vpop.f32.mrf.mxu0
        %v1161 = vadd.f32 0.0, %v1160
        %v1162 = vpop.f32.mrf.mxu0
        %1163 = vdwg.mxu0
        %v1164 = vlaneseq
        %v1165 = vshrl.u32 %v1164, 7
        %v1166 = vsub.s32 0, %v1165
        %v1167 = vrot.slane %v1161, %v1166
        %v1168 = vsub.f32 %v1087, %v1167
        %v1169 = vmin.f32 %v1168, 0.0
        %v1170 = vmul.f32 %v1169, 1.442695
        %v1171 = vpow.pop %v1170
        %v1172 = vsel %vm703, %v1171, 0.0
        %v1173 = vmul.f32 %v1056, %v1172
        %v1174 = vlaneseq
        %v1175 = vshrl.u32 %v1174, 7
        %v1176 = vsub.s32 0, %v1175
        %v1177 = vrot.slane %v1077, %v1176
        %v1178 = vmul.f32 %v1173, %v1177
        %v1179 = vstv %s1060
        %v1180 = vmul.f32 %v1179, %v978
        %v1182 = vsel %vm716, %v1178, 0
        %1184 = vmatprep.subr.mxu0 0.0
        %1185 = vmatpush1.msra.mxu0 0.0
        %1186 = vmatprep.subr.mxu0 0.0
        %1187 = vmatpush1.msra.mxu0 0.0
        %1188 = vmatprep.subr.mxu0 0.0
        %1189 = vmatpush1.msra.mxu0 0.0
        %1190 = vmatprep.subr.mxu0 0.0
        %1191 = vmatpush1.msra.mxu0 0.0
        %1192 = vmatprep.subr.mxu0 0.0
        %1193 = vmatpush1.msra.mxu0 0.0
        %1194 = vmatprep.subr.mxu0 0.0
        %1195 = vmatpush1.msra.mxu0 0.0
        %1196 = vmatprep.subr.mxu0 0.0
        %1197 = vmatpush1.msra.mxu0 0.0
        %1198 = vmatprep.subr.mxu0 0.0
        %1199 = vmatpush1.msra.mxu0 0.0
        %1200 = vmatprep.subr.mxu0 0.0
        %1201 = vmatpush1.msra.mxu0 0.0
        %1202 = vmatprep.subr.mxu0 0.0
        %1203 = vmatpush1.msra.mxu0 0.0
        %1204 = vmatprep.subr.mxu0 0.0
        %1205 = vmatpush1.msra.mxu0 0.0
        %1206 = vmatprep.subr.mxu0 0.0
        %1207 = vmatpush1.msra.mxu0 0.0
        %1208 = vmatprep.subr.mxu0 0.0
        %1209 = vmatpush1.msra.mxu0 0.0
        %1210 = vmatprep.subr.mxu0 0.0
        %1211 = vmatpush1.msra.mxu0 0.0
        %1212 = vmatprep.subr.mxu0 0.0
        %1213 = vmatpush1.msra.mxu0 0.0
        %1214 = vmatprep.subr.mxu0 0.0
        %1215 = vmatpush1.msra.mxu0 %v978
        %1216 = vmatprep.subr.mxu0 0.0
        %1217 = vmatpush2.msra.mxu0 0.0
        %1218 = vmatprep.subr.mxu0 0.0
        %1219 = vmatpush2.msra.mxu0 0.0
        %1220 = vmatprep.subr.mxu0 0.0
        %1221 = vmatpush2.msra.mxu0 0.0
        %1222 = vmatprep.subr.mxu0 0.0
        %1223 = vmatpush2.msra.mxu0 0.0
        %1224 = vmatprep.subr.mxu0 0.0
        %1225 = vmatpush2.msra.mxu0 0.0
        %1226 = vmatprep.subr.mxu0 0.0
        %1227 = vmatpush2.msra.mxu0 0.0
        %1228 = vmatprep.subr.mxu0 0.0
        %1229 = vmatpush2.msra.mxu0 0.0
        %1230 = vmatprep.subr.mxu0 0.0
        %1231 = vmatpush2.msra.mxu0 0.0
        %1232 = vmatprep.subr.mxu0 0.0
        %1233 = vmatpush2.msra.mxu0 0.0
        %1234 = vmatprep.subr.mxu0 0.0
        %1235 = vmatpush2.msra.mxu0 0.0
        %1236 = vmatprep.subr.mxu0 0.0
        %1237 = vmatpush2.msra.mxu0 0.0
        %1238 = vmatprep.subr.mxu0 0.0
        %1239 = vmatpush2.msra.mxu0 0.0
        %1240 = vmatprep.subr.mxu0 0.0
        %1241 = vmatpush2.msra.mxu0 0.0
        %1242 = vmatprep.subr.mxu0 0.0
        %1243 = vmatpush2.msra.mxu0 0.0
        %1244 = vmatprep.subr.mxu0 0.0
        %1245 = vmatpush2.msra.mxu0 0.0
        %1246 = vmatprep.subr.mxu0 0.0
        %1247 = vmatpush2.msra.mxu0 0.0
        %1248 = vmatprep.mubr.f32.mxu0 0.0
        %1249 = vmatmul.mubr.f32.gmra.mxu0 %v1182
        %v1250 = vpop.f32.mrf.mxu0
        %v1251 = vadd.f32 %v1180, %v1250
        %v1252 = vpop.f32.mrf.mxu0
        %1253 = vdwg.mxu0
        %s1254 = sld [smem:[#allocation2 + $0x1]]
        %s1255 = sld [smem:[#allocation5 + $0x1]]
        %s1256 = sld [smem:[#allocation7 + $0x1]]
        %v1257 = vstv %s1256
        %v1258 = vadd.f32 %v696, %v1257
        %vm1259 = vcmp.gt.f32.partialorder %v1258, 20.0
        %v1260 = vmin.f32 %v1258, 20.0
        %v1261 = vmul.f32 %v1260, 1.442695
        %v1262 = vpow.pop %v1261
        %v1263 = vadd.f32 %v1262, 1.0
        %v1264 = vlog2.pop %v1263
        %v1265 = vmul.f32 %v1264, 0.6931472
        %v1266 = vmul.f32 -0.5, %v1262
        %v1267 = vadd.f32 %v1266, 1.0
        %v1268 = vmul.f32 %v1267, %v1262
        %v1269 = vand.u32 2147483647, %v1262
        %vm1270 = vcmp.lt.f32.partialorder %v1269, 0.0004427343
        %v1271 = vsel %vm1270, %v1268, %v1265
        %v1272 = vsel %vm1259, %v1258, %v1271
        %v1273 = vstv %s1254
        %v1274 = vmul.f32 %v1272, %v1273
        %v1275 = vlaneseq
        %v1276 = vshrl.u32 %v1275, 7
        %v1277 = vsub.s32 1, %v1276
        %v1278 = vrot.slane %v1274, %v1277
        %v1279 = vmul.f32 %v705, %v1278
        %v1280 = vsel %vm716, %v1279, 0.0
        %1281 = vadd.xlane.f32.xlu0 %v1280
        %v1282 = vpop.xlane.xlu0 %1281
        %v1284 = vrot.slane %v1274, 1
        %v1285 = vsel %vm716, %v1284, 0
        %1287 = vmatprep.subr.mxu0 0.0
        %1288 = vmatpush1.xpose.msra.mxu0 0.0
        %1289 = vmatprep.subr.mxu0 0.0
        %1290 = vmatpush1.xpose.msra.mxu0 0.0
        %1291 = vmatprep.subr.mxu0 0.0
        %1292 = vmatpush1.xpose.msra.mxu0 0.0
        %1293 = vmatprep.subr.mxu0 0.0
        %1294 = vmatpush1.xpose.msra.mxu0 0.0
        %1295 = vmatprep.subr.mxu0 0.0
        %1296 = vmatpush1.xpose.msra.mxu0 0.0
        %1297 = vmatprep.subr.mxu0 0.0
        %1298 = vmatpush1.xpose.msra.mxu0 0.0
        %1299 = vmatprep.subr.mxu0 0.0
        %1300 = vmatpush1.xpose.msra.mxu0 0.0
        %1301 = vmatprep.subr.mxu0 0.0
        %1302 = vmatpush1.xpose.msra.mxu0 0.0
        %1303 = vmatprep.subr.mxu0 0.0
        %1304 = vmatpush1.xpose.msra.mxu0 0.0
        %1305 = vmatprep.subr.mxu0 0.0
        %1306 = vmatpush1.xpose.msra.mxu0 0.0
        %1307 = vmatprep.subr.mxu0 0.0
        %1308 = vmatpush1.xpose.msra.mxu0 0.0
        %1309 = vmatprep.subr.mxu0 0.0
        %1310 = vmatpush1.xpose.msra.mxu0 0.0
        %1311 = vmatprep.subr.mxu0 0.0
        %1312 = vmatpush1.xpose.msra.mxu0 0.0
        %1313 = vmatprep.subr.mxu0 0.0
        %1314 = vmatpush1.xpose.msra.mxu0 0.0
        %1315 = vmatprep.subr.mxu0 0.0
        %1316 = vmatpush1.xpose.msra.mxu0 0.0
        %1317 = vmatprep.subr.mxu0 0.0
        %1318 = vmatpush1.xpose.msra.mxu0 %v1092
        %1319 = vmatprep.subr.mxu0 0.0
        %1320 = vmatpush2.xpose.msra.mxu0 0.0
        %1321 = vmatprep.subr.mxu0 0.0
        %1322 = vmatpush2.xpose.msra.mxu0 0.0
        %1323 = vmatprep.subr.mxu0 0.0
        %1324 = vmatpush2.xpose.msra.mxu0 0.0
        %1325 = vmatprep.subr.mxu0 0.0
        %1326 = vmatpush2.xpose.msra.mxu0 0.0
        %1327 = vmatprep.subr.mxu0 0.0
        %1328 = vmatpush2.xpose.msra.mxu0 0.0
        %1329 = vmatprep.subr.mxu0 0.0
        %1330 = vmatpush2.xpose.msra.mxu0 0.0
        %1331 = vmatprep.subr.mxu0 0.0
        %1332 = vmatpush2.xpose.msra.mxu0 0.0
        %1333 = vmatprep.subr.mxu0 0.0
        %1334 = vmatpush2.xpose.msra.mxu0 0.0
        %1335 = vmatprep.subr.mxu0 0.0
        %1336 = vmatpush2.xpose.msra.mxu0 0.0
        %1337 = vmatprep.subr.mxu0 0.0
        %1338 = vmatpush2.xpose.msra.mxu0 0.0
        %1339 = vmatprep.subr.mxu0 0.0
        %1340 = vmatpush2.xpose.msra.mxu0 0.0
        %1341 = vmatprep.subr.mxu0 0.0
        %1342 = vmatpush2.xpose.msra.mxu0 0.0
        %1343 = vmatprep.subr.mxu0 0.0
        %1344 = vmatpush2.xpose.msra.mxu0 0.0
        %1345 = vmatprep.subr.mxu0 0.0
        %1346 = vmatpush2.xpose.msra.mxu0 0.0
        %1347 = vmatprep.subr.mxu0 0.0
        %1348 = vmatpush2.xpose.msra.mxu0 0.0
        %1349 = vmatprep.subr.mxu0 0.0
        %1350 = vmatpush2.xpose.msra.mxu0 0.0
        %1351 = vmatprep.mubr.f32.mxu0 0.0
        %1352 = vmatmul.mubr.f32.gmra.mxu0 %v1285
        %v1353 = vpop.f32.mrf.mxu0
        %v1354 = vadd.f32 0.0, %v1353
        %v1355 = vpop.f32.mrf.mxu0
        %1356 = vdwg.mxu0
        %v1357 = vlaneseq
        %v1358 = vshrl.u32 %v1357, 7
        %v1359 = vsub.s32 0, %v1358
        %v1360 = vrot.slane %v1354, %v1359
        %v1361 = vsub.f32 %v1282, %v1360
        %v1362 = vmin.f32 %v1361, 0.0
        %v1363 = vmul.f32 %v1362, 1.442695
        %v1364 = vpow.pop %v1363
        %v1365 = vsel %vm703, %v1364, 0.0
        %v1366 = vmul.f32 %v1056, %v1365
        %v1367 = vlaneseq
        %v1368 = vshrl.u32 %v1367, 7
        %v1369 = vsub.s32 1, %v1368
        %v1370 = vrot.slane %v1272, %v1369
        %v1371 = vmul.f32 %v1366, %v1370
        %v1372 = vstv %s1255
        %v1373 = vmul.f32 %v1372, %v978
        %1374 = vrot.lane.b32.xlu0 %v978, 112
        %v1375 = vpop.permute.xlu0 %1374
        %1378 = vrot.lane.b32.xlu0 %v1373, 112
        %v1379 = vpop.permute.xlu0 %1378
        %v1382 = vsel %vm716, %v1371, 0
        %1384 = vmatprep.subr.mxu0 0.0
        %1385 = vmatpush1.msra.mxu0 0.0
        %1386 = vmatprep.subr.mxu0 0.0
        %1387 = vmatpush1.msra.mxu0 0.0
        %1388 = vmatprep.subr.mxu0 0.0
        %1389 = vmatpush1.msra.mxu0 0.0
        %1390 = vmatprep.subr.mxu0 0.0
        %1391 = vmatpush1.msra.mxu0 0.0
        %1392 = vmatprep.subr.mxu0 0.0
        %1393 = vmatpush1.msra.mxu0 0.0
        %1394 = vmatprep.subr.mxu0 0.0
        %1395 = vmatpush1.msra.mxu0 0.0
        %1396 = vmatprep.subr.mxu0 0.0
        %1397 = vmatpush1.msra.mxu0 0.0
        %1398 = vmatprep.subr.mxu0 0.0
        %1399 = vmatpush1.msra.mxu0 0.0
        %1400 = vmatprep.subr.mxu0 0.0
        %1401 = vmatpush1.msra.mxu0 0.0
        %1402 = vmatprep.subr.mxu0 0.0
        %1403 = vmatpush1.msra.mxu0 0.0
        %1404 = vmatprep.subr.mxu0 0.0
        %1405 = vmatpush1.msra.mxu0 0.0
        %1406 = vmatprep.subr.mxu0 0.0
        %1407 = vmatpush1.msra.mxu0 0.0
        %1408 = vmatprep.subr.mxu0 0.0
        %1409 = vmatpush1.msra.mxu0 0.0
        %1410 = vmatprep.subr.mxu0 0.0
        %1411 = vmatpush1.msra.mxu0 0.0
        %1412 = vmatprep.subr.mxu0 0.0
        %1413 = vmatpush1.msra.mxu0 0.0
        %1414 = vmatprep.subr.mxu0 0.0
        %1415 = vmatpush1.msra.mxu0 %v1375
        %1416 = vmatprep.subr.mxu0 0.0
        %1417 = vmatpush2.msra.mxu0 0.0
        %1418 = vmatprep.subr.mxu0 0.0
        %1419 = vmatpush2.msra.mxu0 0.0
        %1420 = vmatprep.subr.mxu0 0.0
        %1421 = vmatpush2.msra.mxu0 0.0
        %1422 = vmatprep.subr.mxu0 0.0
        %1423 = vmatpush2.msra.mxu0 0.0
        %1424 = vmatprep.subr.mxu0 0.0
        %1425 = vmatpush2.msra.mxu0 0.0
        %1426 = vmatprep.subr.mxu0 0.0
        %1427 = vmatpush2.msra.mxu0 0.0
        %1428 = vmatprep.subr.mxu0 0.0
        %1429 = vmatpush2.msra.mxu0 0.0
        %1430 = vmatprep.subr.mxu0 0.0
        %1431 = vmatpush2.msra.mxu0 0.0
        %1432 = vmatprep.subr.mxu0 0.0
        %1433 = vmatpush2.msra.mxu0 0.0
        %1434 = vmatprep.subr.mxu0 0.0
        %1435 = vmatpush2.msra.mxu0 0.0
        %1436 = vmatprep.subr.mxu0 0.0
        %1437 = vmatpush2.msra.mxu0 0.0
        %1438 = vmatprep.subr.mxu0 0.0
        %1439 = vmatpush2.msra.mxu0 0.0
        %1440 = vmatprep.subr.mxu0 0.0
        %1441 = vmatpush2.msra.mxu0 0.0
        %1442 = vmatprep.subr.mxu0 0.0
        %1443 = vmatpush2.msra.mxu0 0.0
        %1444 = vmatprep.subr.mxu0 0.0
        %1445 = vmatpush2.msra.mxu0 0.0
        %1446 = vmatprep.subr.mxu0 0.0
        %1447 = vmatpush2.msra.mxu0 0.0
        %1448 = vmatprep.mubr.f32.mxu0 0.0
        %1449 = vmatmul.mubr.f32.gmra.mxu0 %v1382
        %v1450 = vpop.f32.mrf.mxu0
        %v1451 = vadd.f32 %v1379, %v1450
        %v1452 = vpop.f32.mrf.mxu0
        %1453 = vdwg.mxu0
        %s1454 = sld [smem:[#allocation2 + $0x2]]
        %s1455 = sld [smem:[#allocation5 + $0x2]]
        %s1456 = sld [smem:[#allocation7 + $0x2]]
        %v1457 = vstv %s1456
        %v1458 = vadd.f32 %v696, %v1457
        %vm1459 = vcmp.gt.f32.partialorder %v1458, 20.0
        %v1460 = vmin.f32 %v1458, 20.0
        %v1461 = vmul.f32 %v1460, 1.442695
        %v1462 = vpow.pop %v1461
        %v1463 = vadd.f32 %v1462, 1.0
        %v1464 = vlog2.pop %v1463
        %v1465 = vmul.f32 %v1464, 0.6931472
        %v1466 = vmul.f32 -0.5, %v1462
        %v1467 = vadd.f32 %v1466, 1.0
        %v1468 = vmul.f32 %v1467, %v1462
        %v1469 = vand.u32 2147483647, %v1462
        %vm1470 = vcmp.lt.f32.partialorder %v1469, 0.0004427343
        %v1471 = vsel %vm1470, %v1468, %v1465
        %v1472 = vsel %vm1459, %v1458, %v1471
        %v1473 = vstv %s1454
        %v1474 = vmul.f32 %v1472, %v1473
        %v1475 = vlaneseq
        %v1476 = vshrl.u32 %v1475, 7
        %v1477 = vsub.s32 2, %v1476
        %v1478 = vrot.slane %v1474, %v1477
        %v1479 = vmul.f32 %v705, %v1478
        %v1480 = vsel %vm716, %v1479, 0.0
        %1481 = vadd.xlane.f32.xlu0 %v1480
        %v1482 = vpop.xlane.xlu0 %1481
        %v1484 = vrot.slane %v1474, 2
        %v1485 = vsel %vm716, %v1484, 0
        %1487 = vmatprep.subr.mxu0 0.0
        %1488 = vmatpush1.xpose.msra.mxu0 0.0
        %1489 = vmatprep.subr.mxu0 0.0
        %1490 = vmatpush1.xpose.msra.mxu0 0.0
        %1491 = vmatprep.subr.mxu0 0.0
        %1492 = vmatpush1.xpose.msra.mxu0 0.0
        %1493 = vmatprep.subr.mxu0 0.0
        %1494 = vmatpush1.xpose.msra.mxu0 0.0
        %1495 = vmatprep.subr.mxu0 0.0
        %1496 = vmatpush1.xpose.msra.mxu0 0.0
        %1497 = vmatprep.subr.mxu0 0.0
        %1498 = vmatpush1.xpose.msra.mxu0 0.0
        %1499 = vmatprep.subr.mxu0 0.0
        %1500 = vmatpush1.xpose.msra.mxu0 0.0
        %1501 = vmatprep.subr.mxu0 0.0
        %1502 = vmatpush1.xpose.msra.mxu0 0.0
        %1503 = vmatprep.subr.mxu0 0.0
        %1504 = vmatpush1.xpose.msra.mxu0 0.0
        %1505 = vmatprep.subr.mxu0 0.0
        %1506 = vmatpush1.xpose.msra.mxu0 0.0
        %1507 = vmatprep.subr.mxu0 0.0
        %1508 = vmatpush1.xpose.msra.mxu0 0.0
        %1509 = vmatprep.subr.mxu0 0.0
        %1510 = vmatpush1.xpose.msra.mxu0 0.0
        %1511 = vmatprep.subr.mxu0 0.0
        %1512 = vmatpush1.xpose.msra.mxu0 0.0
        %1513 = vmatprep.subr.mxu0 0.0
        %1514 = vmatpush1.xpose.msra.mxu0 0.0
        %1515 = vmatprep.subr.mxu0 0.0
        %1516 = vmatpush1.xpose.msra.mxu0 0.0
        %1517 = vmatprep.subr.mxu0 0.0
        %1518 = vmatpush1.xpose.msra.mxu0 %v1092
        %1519 = vmatprep.subr.mxu0 0.0
        %1520 = vmatpush2.xpose.msra.mxu0 0.0
        %1521 = vmatprep.subr.mxu0 0.0
        %1522 = vmatpush2.xpose.msra.mxu0 0.0
        %1523 = vmatprep.subr.mxu0 0.0
        %1524 = vmatpush2.xpose.msra.mxu0 0.0
        %1525 = vmatprep.subr.mxu0 0.0
        %1526 = vmatpush2.xpose.msra.mxu0 0.0
        %1527 = vmatprep.subr.mxu0 0.0
        %1528 = vmatpush2.xpose.msra.mxu0 0.0
        %1529 = vmatprep.subr.mxu0 0.0
        %1530 = vmatpush2.xpose.msra.mxu0 0.0
        %1531 = vmatprep.subr.mxu0 0.0
        %1532 = vmatpush2.xpose.msra.mxu0 0.0
        %1533 = vmatprep.subr.mxu0 0.0
        %1534 = vmatpush2.xpose.msra.mxu0 0.0
        %1535 = vmatprep.subr.mxu0 0.0
        %1536 = vmatpush2.xpose.msra.mxu0 0.0
        %1537 = vmatprep.subr.mxu0 0.0
        %1538 = vmatpush2.xpose.msra.mxu0 0.0
        %1539 = vmatprep.subr.mxu0 0.0
        %1540 = vmatpush2.xpose.msra.mxu0 0.0
        %1541 = vmatprep.subr.mxu0 0.0
        %1542 = vmatpush2.xpose.msra.mxu0 0.0
        %1543 = vmatprep.subr.mxu0 0.0
        %1544 = vmatpush2.xpose.msra.mxu0 0.0
        %1545 = vmatprep.subr.mxu0 0.0
        %1546 = vmatpush2.xpose.msra.mxu0 0.0
        %1547 = vmatprep.subr.mxu0 0.0
        %1548 = vmatpush2.xpose.msra.mxu0 0.0
        %1549 = vmatprep.subr.mxu0 0.0
        %1550 = vmatpush2.xpose.msra.mxu0 0.0
        %1551 = vmatprep.mubr.f32.mxu0 0.0
        %1552 = vmatmul.mubr.f32.gmra.mxu0 %v1485
        %v1553 = vpop.f32.mrf.mxu0
        %v1554 = vadd.f32 0.0, %v1553
        %v1555 = vpop.f32.mrf.mxu0
        %1556 = vdwg.mxu0
        %v1557 = vlaneseq
        %v1558 = vshrl.u32 %v1557, 7
        %v1559 = vsub.s32 0, %v1558
        %v1560 = vrot.slane %v1554, %v1559
        %v1561 = vsub.f32 %v1482, %v1560
        %v1562 = vmin.f32 %v1561, 0.0
        %v1563 = vmul.f32 %v1562, 1.442695
        %v1564 = vpow.pop %v1563
        %v1565 = vsel %vm703, %v1564, 0.0
        %v1566 = vmul.f32 %v1056, %v1565
        %v1567 = vlaneseq
        %v1568 = vshrl.u32 %v1567, 7
        %v1569 = vsub.s32 2, %v1568
        %v1570 = vrot.slane %v1472, %v1569
        %v1571 = vmul.f32 %v1566, %v1570
        %v1572 = vstv %s1455
        %v1573 = vmul.f32 %v1572, %v978
        %1574 = vrot.lane.b32.xlu0 %v978, 96
        %v1575 = vpop.permute.xlu0 %1574
        %1578 = vrot.lane.b32.xlu0 %v1573, 96
        %v1579 = vpop.permute.xlu0 %1578
        %v1582 = vsel %vm716, %v1571, 0
        %1584 = vmatprep.subr.mxu0 0.0
        %1585 = vmatpush1.msra.mxu0 0.0
        %1586 = vmatprep.subr.mxu0 0.0
        %1587 = vmatpush1.msra.mxu0 0.0
        %1588 = vmatprep.subr.mxu0 0.0
        %1589 = vmatpush1.msra.mxu0 0.0
        %1590 = vmatprep.subr.mxu0 0.0
        %1591 = vmatpush1.msra.mxu0 0.0
        %1592 = vmatprep.subr.mxu0 0.0
        %1593 = vmatpush1.msra.mxu0 0.0
        %1594 = vmatprep.subr.mxu0 0.0
        %1595 = vmatpush1.msra.mxu0 0.0
        %1596 = vmatprep.subr.mxu0 0.0
        %1597 = vmatpush1.msra.mxu0 0.0
        %1598 = vmatprep.subr.mxu0 0.0
        %1599 = vmatpush1.msra.mxu0 0.0
        %1600 = vmatprep.subr.mxu0 0.0
        %1601 = vmatpush1.msra.mxu0 0.0
        %1602 = vmatprep.subr.mxu0 0.0
        %1603 = vmatpush1.msra.mxu0 0.0
        %1604 = vmatprep.subr.mxu0 0.0
        %1605 = vmatpush1.msra.mxu0 0.0
        %1606 = vmatprep.subr.mxu0 0.0
        %1607 = vmatpush1.msra.mxu0 0.0
        %1608 = vmatprep.subr.mxu0 0.0
        %1609 = vmatpush1.msra.mxu0 0.0
        %1610 = vmatprep.subr.mxu0 0.0
        %1611 = vmatpush1.msra.mxu0 0.0
        %1612 = vmatprep.subr.mxu0 0.0
        %1613 = vmatpush1.msra.mxu0 0.0
        %1614 = vmatprep.subr.mxu0 0.0
        %1615 = vmatpush1.msra.mxu0 %v1575
        %1616 = vmatprep.subr.mxu0 0.0
        %1617 = vmatpush2.msra.mxu0 0.0
        %1618 = vmatprep.subr.mxu0 0.0
        %1619 = vmatpush2.msra.mxu0 0.0
        %1620 = vmatprep.subr.mxu0 0.0
        %1621 = vmatpush2.msra.mxu0 0.0
        %1622 = vmatprep.subr.mxu0 0.0
        %1623 = vmatpush2.msra.mxu0 0.0
        %1624 = vmatprep.subr.mxu0 0.0
        %1625 = vmatpush2.msra.mxu0 0.0
        %1626 = vmatprep.subr.mxu0 0.0
        %1627 = vmatpush2.msra.mxu0 0.0
        %1628 = vmatprep.subr.mxu0 0.0
        %1629 = vmatpush2.msra.mxu0 0.0
        %1630 = vmatprep.subr.mxu0 0.0
        %1631 = vmatpush2.msra.mxu0 0.0
        %1632 = vmatprep.subr.mxu0 0.0
        %1633 = vmatpush2.msra.mxu0 0.0
        %1634 = vmatprep.subr.mxu0 0.0
        %1635 = vmatpush2.msra.mxu0 0.0
        %1636 = vmatprep.subr.mxu0 0.0
        %1637 = vmatpush2.msra.mxu0 0.0
        %1638 = vmatprep.subr.mxu0 0.0
        %1639 = vmatpush2.msra.mxu0 0.0
        %1640 = vmatprep.subr.mxu0 0.0
        %1641 = vmatpush2.msra.mxu0 0.0
        %1642 = vmatprep.subr.mxu0 0.0
        %1643 = vmatpush2.msra.mxu0 0.0
        %1644 = vmatprep.subr.mxu0 0.0
        %1645 = vmatpush2.msra.mxu0 0.0
        %1646 = vmatprep.subr.mxu0 0.0
        %1647 = vmatpush2.msra.mxu0 0.0
        %1648 = vmatprep.mubr.f32.mxu0 0.0
        %1649 = vmatmul.mubr.f32.gmra.mxu0 %v1582
        %v1650 = vpop.f32.mrf.mxu0
        %v1651 = vadd.f32 %v1579, %v1650
        %v1652 = vpop.f32.mrf.mxu0
        %1653 = vdwg.mxu0
        %s1654 = sld [smem:[#allocation2 + $0x3]]
        %s1655 = sld [smem:[#allocation5 + $0x3]]
        %s1656 = sld [smem:[#allocation7 + $0x3]]
        %v1657 = vstv %s1656
        %v1658 = vadd.f32 %v696, %v1657
        %vm1659 = vcmp.gt.f32.partialorder %v1658, 20.0
        %v1660 = vmin.f32 %v1658, 20.0
        %v1661 = vmul.f32 %v1660, 1.442695
        %v1662 = vpow.pop %v1661
        %v1663 = vadd.f32 %v1662, 1.0
        %v1664 = vlog2.pop %v1663
        %v1665 = vmul.f32 %v1664, 0.6931472
        %v1666 = vmul.f32 -0.5, %v1662
        %v1667 = vadd.f32 %v1666, 1.0
        %v1668 = vmul.f32 %v1667, %v1662
        %v1669 = vand.u32 2147483647, %v1662
        %vm1670 = vcmp.lt.f32.partialorder %v1669, 0.0004427343
        %v1671 = vsel %vm1670, %v1668, %v1665
        %v1672 = vsel %vm1659, %v1658, %v1671
        %v1673 = vstv %s1654
        %v1674 = vmul.f32 %v1672, %v1673
        %v1675 = vlaneseq
        %v1676 = vshrl.u32 %v1675, 7
        %v1677 = vsub.s32 3, %v1676
        %v1678 = vrot.slane %v1674, %v1677
        %v1679 = vmul.f32 %v705, %v1678
        %v1680 = vsel %vm716, %v1679, 0.0
        %1681 = vadd.xlane.f32.xlu0 %v1680
        %v1682 = vpop.xlane.xlu0 %1681
        %v1684 = vrot.slane %v1674, 3
        %v1685 = vsel %vm716, %v1684, 0
        %1687 = vmatprep.subr.mxu0 0.0
        %1688 = vmatpush1.xpose.msra.mxu0 0.0
        %1689 = vmatprep.subr.mxu0 0.0
        %1690 = vmatpush1.xpose.msra.mxu0 0.0
        %1691 = vmatprep.subr.mxu0 0.0
        %1692 = vmatpush1.xpose.msra.mxu0 0.0
        %1693 = vmatprep.subr.mxu0 0.0
        %1694 = vmatpush1.xpose.msra.mxu0 0.0
        %1695 = vmatprep.subr.mxu0 0.0
        %1696 = vmatpush1.xpose.msra.mxu0 0.0
        %1697 = vmatprep.subr.mxu0 0.0
        %1698 = vmatpush1.xpose.msra.mxu0 0.0
        %1699 = vmatprep.subr.mxu0 0.0
        %1700 = vmatpush1.xpose.msra.mxu0 0.0
        %1701 = vmatprep.subr.mxu0 0.0
        %1702 = vmatpush1.xpose.msra.mxu0 0.0
        %1703 = vmatprep.subr.mxu0 0.0
        %1704 = vmatpush1.xpose.msra.mxu0 0.0
        %1705 = vmatprep.subr.mxu0 0.0
        %1706 = vmatpush1.xpose.msra.mxu0 0.0
        %1707 = vmatprep.subr.mxu0 0.0
        %1708 = vmatpush1.xpose.msra.mxu0 0.0
        %1709 = vmatprep.subr.mxu0 0.0
        %1710 = vmatpush1.xpose.msra.mxu0 0.0
        %1711 = vmatprep.subr.mxu0 0.0
        %1712 = vmatpush1.xpose.msra.mxu0 0.0
        %1713 = vmatprep.subr.mxu0 0.0
        %1714 = vmatpush1.xpose.msra.mxu0 0.0
        %1715 = vmatprep.subr.mxu0 0.0
        %1716 = vmatpush1.xpose.msra.mxu0 0.0
        %1717 = vmatprep.subr.mxu0 0.0
        %1718 = vmatpush1.xpose.msra.mxu0 %v1092
        %1719 = vmatprep.subr.mxu0 0.0
        %1720 = vmatpush2.xpose.msra.mxu0 0.0
        %1721 = vmatprep.subr.mxu0 0.0
        %1722 = vmatpush2.xpose.msra.mxu0 0.0
        %1723 = vmatprep.subr.mxu0 0.0
        %1724 = vmatpush2.xpose.msra.mxu0 0.0
        %1725 = vmatprep.subr.mxu0 0.0
        %1726 = vmatpush2.xpose.msra.mxu0 0.0
        %1727 = vmatprep.subr.mxu0 0.0
        %1728 = vmatpush2.xpose.msra.mxu0 0.0
        %1729 = vmatprep.subr.mxu0 0.0
        %1730 = vmatpush2.xpose.msra.mxu0 0.0
        %1731 = vmatprep.subr.mxu0 0.0
        %1732 = vmatpush2.xpose.msra.mxu0 0.0
        %1733 = vmatprep.subr.mxu0 0.0
        %1734 = vmatpush2.xpose.msra.mxu0 0.0
        %1735 = vmatprep.subr.mxu0 0.0
        %1736 = vmatpush2.xpose.msra.mxu0 0.0
        %1737 = vmatprep.subr.mxu0 0.0
        %1738 = vmatpush2.xpose.msra.mxu0 0.0
        %1739 = vmatprep.subr.mxu0 0.0
        %1740 = vmatpush2.xpose.msra.mxu0 0.0
        %1741 = vmatprep.subr.mxu0 0.0
        %1742 = vmatpush2.xpose.msra.mxu0 0.0
        %1743 = vmatprep.subr.mxu0 0.0
        %1744 = vmatpush2.xpose.msra.mxu0 0.0
        %1745 = vmatprep.subr.mxu0 0.0
        %1746 = vmatpush2.xpose.msra.mxu0 0.0
        %1747 = vmatprep.subr.mxu0 0.0
        %1748 = vmatpush2.xpose.msra.mxu0 0.0
        %1749 = vmatprep.subr.mxu0 0.0
        %1750 = vmatpush2.xpose.msra.mxu0 0.0
        %1751 = vmatprep.mubr.f32.mxu0 0.0
        %1752 = vmatmul.mubr.f32.gmra.mxu0 %v1685
        %v1753 = vpop.f32.mrf.mxu0
        %v1754 = vadd.f32 0.0, %v1753
        %v1755 = vpop.f32.mrf.mxu0
        %1756 = vdwg.mxu0
        %v1757 = vlaneseq
        %v1758 = vshrl.u32 %v1757, 7
        %v1759 = vsub.s32 0, %v1758
        %v1760 = vrot.slane %v1754, %v1759
        %v1761 = vsub.f32 %v1682, %v1760
        %v1762 = vmin.f32 %v1761, 0.0
        %v1763 = vmul.f32 %v1762, 1.442695
        %v1764 = vpow.pop %v1763
        %v1765 = vsel %vm703, %v1764, 0.0
        %v1766 = vmul.f32 %v1056, %v1765
        %v1767 = vlaneseq
        %v1768 = vshrl.u32 %v1767, 7
        %v1769 = vsub.s32 3, %v1768
        %v1770 = vrot.slane %v1672, %v1769
        %v1771 = vmul.f32 %v1766, %v1770
        %v1772 = vstv %s1655
        %v1773 = vmul.f32 %v1772, %v978
        %1774 = vrot.lane.b32.xlu0 %v978, 80
        %v1775 = vpop.permute.xlu0 %1774
        %1778 = vrot.lane.b32.xlu0 %v1773, 80
        %v1779 = vpop.permute.xlu0 %1778
        %v1782 = vsel %vm716, %v1771, 0
        %1784 = vmatprep.subr.mxu0 0.0
        %1785 = vmatpush1.msra.mxu0 0.0
        %1786 = vmatprep.subr.mxu0 0.0
        %1787 = vmatpush1.msra.mxu0 0.0
        %1788 = vmatprep.subr.mxu0 0.0
        %1789 = vmatpush1.msra.mxu0 0.0
        %1790 = vmatprep.subr.mxu0 0.0
        %1791 = vmatpush1.msra.mxu0 0.0
        %1792 = vmatprep.subr.mxu0 0.0
        %1793 = vmatpush1.msra.mxu0 0.0
        %1794 = vmatprep.subr.mxu0 0.0
        %1795 = vmatpush1.msra.mxu0 0.0
        %1796 = vmatprep.subr.mxu0 0.0
        %1797 = vmatpush1.msra.mxu0 0.0
        %1798 = vmatprep.subr.mxu0 0.0
        %1799 = vmatpush1.msra.mxu0 0.0
        %1800 = vmatprep.subr.mxu0 0.0
        %1801 = vmatpush1.msra.mxu0 0.0
        %1802 = vmatprep.subr.mxu0 0.0
        %1803 = vmatpush1.msra.mxu0 0.0
        %1804 = vmatprep.subr.mxu0 0.0
        %1805 = vmatpush1.msra.mxu0 0.0
        %1806 = vmatprep.subr.mxu0 0.0
        %1807 = vmatpush1.msra.mxu0 0.0
        %1808 = vmatprep.subr.mxu0 0.0
        %1809 = vmatpush1.msra.mxu0 0.0
        %1810 = vmatprep.subr.mxu0 0.0
        %1811 = vmatpush1.msra.mxu0 0.0
        %1812 = vmatprep.subr.mxu0 0.0
        %1813 = vmatpush1.msra.mxu0 0.0
        %1814 = vmatprep.subr.mxu0 0.0
        %1815 = vmatpush1.msra.mxu0 %v1775
        %1816 = vmatprep.subr.mxu0 0.0
        %1817 = vmatpush2.msra.mxu0 0.0
        %1818 = vmatprep.subr.mxu0 0.0
        %1819 = vmatpush2.msra.mxu0 0.0
        %1820 = vmatprep.subr.mxu0 0.0
        %1821 = vmatpush2.msra.mxu0 0.0
        %1822 = vmatprep.subr.mxu0 0.0
        %1823 = vmatpush2.msra.mxu0 0.0
        %1824 = vmatprep.subr.mxu0 0.0
        %1825 = vmatpush2.msra.mxu0 0.0
        %1826 = vmatprep.subr.mxu0 0.0
        %1827 = vmatpush2.msra.mxu0 0.0
        %1828 = vmatprep.subr.mxu0 0.0
        %1829 = vmatpush2.msra.mxu0 0.0
        %1830 = vmatprep.subr.mxu0 0.0
        %1831 = vmatpush2.msra.mxu0 0.0
        %1832 = vmatprep.subr.mxu0 0.0
        %1833 = vmatpush2.msra.mxu0 0.0
        %1834 = vmatprep.subr.mxu0 0.0
        %1835 = vmatpush2.msra.mxu0 0.0
        %1836 = vmatprep.subr.mxu0 0.0
        %1837 = vmatpush2.msra.mxu0 0.0
        %1838 = vmatprep.subr.mxu0 0.0
        %1839 = vmatpush2.msra.mxu0 0.0
        %1840 = vmatprep.subr.mxu0 0.0
        %1841 = vmatpush2.msra.mxu0 0.0
        %1842 = vmatprep.subr.mxu0 0.0
        %1843 = vmatpush2.msra.mxu0 0.0
        %1844 = vmatprep.subr.mxu0 0.0
        %1845 = vmatpush2.msra.mxu0 0.0
        %1846 = vmatprep.subr.mxu0 0.0
        %1847 = vmatpush2.msra.mxu0 0.0
        %1848 = vmatprep.mubr.f32.mxu0 0.0
        %1849 = vmatmul.mubr.f32.gmra.mxu0 %v1782
        %v1850 = vpop.f32.mrf.mxu0
        %v1851 = vadd.f32 %v1779, %v1850
        %v1852 = vpop.f32.mrf.mxu0
        %1853 = vdwg.mxu0
        %1855 = vrot.lane.b32.xlu0 %v1451, 16
        %v1856 = vpop.permute.xlu0 %1855
        %1859 = vrot.lane.b32.xlu0 %v1651, 32
        %v1860 = vpop.permute.xlu0 %1859
        %1863 = vrot.lane.b32.xlu0 %v1851, 48
        %v1864 = vpop.permute.xlu0 %1863
        %v1866 = vsel %vm984, %v1251, %v1856
        %v1867 = vsel %vm477, %v1866, %v1860
        %vm1868 = vcmask 392192
        %v1869 = vsel %vm1868, %v1867, %v1864
        %v1870 = vxor.u32 %v548, 2147483648
        %v1871 = vmul.f32 %v1870, 1.442695
        %v1872 = vpow.pop %v1871
        %v1873 = vadd.f32 %v1872, 1.0
        %v1874 = vrcp.pop %v1873
        %v1875 = vmul.f32 1.0, %v1874
        %v1876 = vmul.f32 %v548, %v1875
        %v1877 = vmul.f32 %v1869, %v1876
        %v1878 = vmul.f32 %v1877, %v1877
        %vm1879 = vcmask 523264
        %v1880 = vsel %vm1879, %v1878, 0.0
        %1881 = vadd.xlane.f32.xlu0 %v1880
        %v1882 = vpop.xlane.xlu0 %1881
        %v1883 = vrcp.pop 64.0
        %v1884 = vmul.f32 %v1882, %v1883
        %v1885 = vadd.f32 %v1884, 1e-05
        %v1886 = vrsqrt.pop %v1885
        %v1887 = vmul.f32 %v1877, %v1886
        %v1888 = vld [vmem:[%s10] sm:$0x1]
        %v1890 = vlaneseq
        %v1891 = vshrl.u32 %v1890, 7
        %v1892 = vsub.s32 0, %v1891
        %v1893 = vrot.slane %v1888, %v1892
        %v1895 = vmul.f32 %v1887, %v1893
        %v1896 = vld [vmem:[%s11] sm:$0xff]
        %v1897 = vld [vmem:[%s11 + $0x8] sm:$0xff]
        %v1898 = vld [vmem:[%s11 + $0x10] sm:$0xff]
        %v1899 = vld [vmem:[%s11 + $0x18] sm:$0xff]
        %v1900 = vld [vmem:[%s11 + $0x20] sm:$0xff]
        %v1901 = vld [vmem:[%s11 + $0x28] sm:$0xff]
        %v1902 = vld [vmem:[%s11 + $0x30] sm:$0xff]
        %v1903 = vld [vmem:[%s11 + $0x38] sm:$0xff]
        %v1905 = vsel %vm1879, %v1895, 0
        %1907 = vmatprep.subr.mxu0 0.0
        %1908 = vmatpush1.msra.mxu0 0.0
        %1909 = vmatprep.subr.mxu0 0.0
        %1910 = vmatpush1.msra.mxu0 0.0
        %1911 = vmatprep.subr.mxu0 0.0
        %1912 = vmatpush1.msra.mxu0 0.0
        %1913 = vmatprep.subr.mxu0 0.0
        %1914 = vmatpush1.msra.mxu0 0.0
        %1915 = vmatprep.subr.mxu0 0.0
        %1916 = vmatpush1.msra.mxu0 0.0
        %1917 = vmatprep.subr.mxu0 0.0
        %1918 = vmatpush1.msra.mxu0 0.0
        %1919 = vmatprep.subr.mxu0 0.0
        %1920 = vmatpush1.msra.mxu0 0.0
        %1921 = vmatprep.subr.mxu0 0.0
        %1922 = vmatpush1.msra.mxu0 0.0
        %1923 = vmatprep.subr.mxu0 0.0
        %1924 = vmatpush1.msra.mxu0 %v1903
        %1925 = vmatprep.subr.mxu0 0.0
        %1926 = vmatpush1.msra.mxu0 %v1902
        %1927 = vmatprep.subr.mxu0 0.0
        %1928 = vmatpush1.msra.mxu0 %v1901
        %1929 = vmatprep.subr.mxu0 0.0
        %1930 = vmatpush1.msra.mxu0 %v1900
        %1931 = vmatprep.subr.mxu0 0.0
        %1932 = vmatpush1.msra.mxu0 %v1899
        %1933 = vmatprep.subr.mxu0 0.0
        %1934 = vmatpush1.msra.mxu0 %v1898
        %1935 = vmatprep.subr.mxu0 0.0
        %1936 = vmatpush1.msra.mxu0 %v1897
        %1937 = vmatprep.subr.mxu0 0.0
        %1938 = vmatpush1.msra.mxu0 %v1896
        %1939 = vmatprep.subr.mxu0 0.0
        %1940 = vmatpush2.msra.mxu0 0.0
        %1941 = vmatprep.subr.mxu0 0.0
        %1942 = vmatpush2.msra.mxu0 0.0
        %1943 = vmatprep.subr.mxu0 0.0
        %1944 = vmatpush2.msra.mxu0 0.0
        %1945 = vmatprep.subr.mxu0 0.0
        %1946 = vmatpush2.msra.mxu0 0.0
        %1947 = vmatprep.subr.mxu0 0.0
        %1948 = vmatpush2.msra.mxu0 0.0
        %1949 = vmatprep.subr.mxu0 0.0
        %1950 = vmatpush2.msra.mxu0 0.0
        %1951 = vmatprep.subr.mxu0 0.0
        %1952 = vmatpush2.msra.mxu0 0.0
        %1953 = vmatprep.subr.mxu0 0.0
        %1954 = vmatpush2.msra.mxu0 0.0
        %1955 = vmatprep.subr.mxu0 0.0
        %1956 = vmatpush2.msra.mxu0 0.0
        %1957 = vmatprep.subr.mxu0 0.0
        %1958 = vmatpush2.msra.mxu0 0.0
        %1959 = vmatprep.subr.mxu0 0.0
        %1960 = vmatpush2.msra.mxu0 0.0
        %1961 = vmatprep.subr.mxu0 0.0
        %1962 = vmatpush2.msra.mxu0 0.0
        %1963 = vmatprep.subr.mxu0 0.0
        %1964 = vmatpush2.msra.mxu0 0.0
        %1965 = vmatprep.subr.mxu0 0.0
        %1966 = vmatpush2.msra.mxu0 0.0
        %1967 = vmatprep.subr.mxu0 0.0
        %1968 = vmatpush2.msra.mxu0 0.0
        %1969 = vmatprep.subr.mxu0 0.0
        %1970 = vmatpush2.msra.mxu0 0.0
        %1971 = vmatprep.mubr.f32.mxu0 0.0
        %1972 = vmatmul.mubr.f32.gmra.mxu0 %v1905
        %v1973 = vpop.f32.mrf.mxu0
        %v1974 = vadd.f32 0.0, %v1973
        %v1975 = vpop.f32.mrf.mxu0
        %1976 = vdwg.mxu0
        %1977 = vst.msk [vmem:[%s456] sm:$0xff] %vm477, %v1974
        %s1978 = sand.u32 %s298, 1
        %s1979 = scalar_lea.sflag [#allocation3], %s1978
        %s1980 = sand.u32 %s298, 1
        %s1981 = smul.addr %s1980, 8
        %s1982 = scalar_lea.vmem [#allocation8], %s1981
        // Predicated region
        $region81: #{tpu_custom_call.1} parent=67 // pred_check
          %p1983 = pneg %p308
        $region82: #{tpu_custom_call.1} parent=67 // pred_check_branch
          %1985 = sbr.rel (%p1983) target = $region84
        $region83: #{tpu_custom_call.1} parent=67 // pred_region
          %s1987 = ssub.s32 128, 128
          %1988 = vsyncadd %s1979, %s1987
          %s1989 = smul.addr %s28, 128
          %s1990 = scalar_lea.hbm %s12, %s1989
          %s1992 = sshll.u32 %s1982, 4
          %s1993 = int_to_ptr.vmem [resolvable:$true] %s1992
          %1995 = dma.vmem_to_hbm [thread:$0]  %s1993, 128, %s1990, %s1979
        $region84: #{tpu_custom_call.1} parent=67 // pred_fallthru
          _
      $region68: #{tpu_custom_call.1} parent=5 // pred_fallthru
        _
      %p1996 = scmp.le.s32.totalorder 2, %s23
      // Predicated region
      $region85: #{tpu_custom_call.1} parent=5 // pred_check
        %p1997 = pneg %p1996
      $region86: #{tpu_custom_call.1} parent=5 // pred_check_branch
        %1999 = sbr.rel (%p1997) target = $region88
      $region87: #{tpu_custom_call.1} parent=5 // pred_region
        %s2000 = ssub.s32 %s23, 2
        // Predicated region
        $region89: #{tpu_custom_call.1} parent=87 // pred_check
          %p2001 = pneg %p314
        $region90: #{tpu_custom_call.1} parent=87 // pred_check_branch
          %2003 = sbr.rel (%p2001) target = $region92
        $region91: #{tpu_custom_call.1} parent=87 // pred_region
          %s2004 = sand.u32 %s299, 1
          %s2005 = scalar_lea.sflag [#allocation3], %s2004
          %s2006 = sand.u32 %s299, 1
          %s2007 = smul.addr %s2006, 8
          %s2008 = scalar_lea.vmem [#allocation8], %s2007
          %2009 = dma.done %s2005, 128
        $region92: #{tpu_custom_call.1} parent=87 // pred_fallthru
          _
      $region88: #{tpu_custom_call.1} parent=5 // pred_fallthru
        _
    $region6: #{tpu_custom_call.1} parent=1 // loop_footer
      %s27 = sadd.s32 1, %s23
    $region7: #{tpu_custom_call.1} parent=1 // loop_footer_branch
      %22 = sbr.rel target = $region3
    $region8: #{tpu_custom_call.1} parent=1 // loop_exit
      _
    %2010 = vsyncpa [#allocation3], 1
    %s2011 = scalar_lea.sflag [#allocation3], 1
    %2012 = vsyncpa %s2011, 1
    %2013 = vsyncpa [#allocation4], 1
    %s2014 = scalar_lea.sflag [#allocation4], 1
    %2015 = vsyncpa %s2014, 1
    %2016 = vsyncpa [#allocation6], 1

</llo_original>
